<compile_context>
chip_gen: v6e
topology: v6e:2x2x1
jax: 0.10.0
libtpu: 0.0.40
codegen_flags: <defaults>
</compile_context>

<pallas_src>
import functools

import jax
import jax.numpy as jnp
from jax.experimental import pallas as pl
from jax.experimental.pallas import tpu as pltpu


def baseline_kernel(x_ref, w1_ref, b1_ref, w2_ref, b2_ref, out_ref, *, batch, bag):
    """Whole-problem kernel — everything resident in VMEM.

    x_ref  : (B*N, F) f32    bag instances flattened to rows (wrapper reshape)
    w1_ref : (F, H)   bf16   pre-cast once at param-prep time
    b1_ref : (1, H)   f32
    w2_ref : (1, H)   f32    classifier weight pre-scaled by 1/N (C == 1 path)
             (H, C)   f32    general case, pre-scaled by 1/N
    b2_ref : (1, C)   f32
    out_ref: (B, C)   f32    sigmoid probabilities
    """
    H = w1_ref.shape[1]
    C = out_ref.shape[1]

    # bf16 cast of x done in VMEM (a few VPU bundles, hidden under the DMA),
    # MXU matmul with f32 accumulation, then bias + ReLU on the VPU.
    x_bf = x_ref[...].astype(jnp.bfloat16)
    h = jnp.dot(x_bf, w1_ref[...], preferred_element_type=jnp.float32)
    h = jnp.maximum(h + b1_ref[...], 0.0)                       # (B*N, H)

    # Bag aggregation: sum over the bag axis (the 1/N of the mean is folded
    # into W2). Reshape only splits the sublane axis; lane axis (H) untouched.
    agg = jnp.sum(h.reshape(batch, bag, H), axis=1)             # (B, H) f32

    if C == 1:
        # Degenerate (N=1) classifier matmul -> VPU multiply + XLU lane reduction.
        logits = jnp.sum(agg * w2_ref[...], axis=-1, keepdims=True) + b2_ref[...]
    else:
        logits = jnp.dot(agg, w2_ref[...], preferred_element_type=jnp.float32) + b2_ref[...]

    out_ref[...] = jax.nn.sigmoid(logits).astype(out_ref.dtype)


def prepare_params(w1, b1, w2, b2, bag_size):
    """ONE-TIME parameter preparation (call at init, not per forward).

    - W1 -> bf16 (halves the dominant HBM operand, cast paid once).
    - 1/N of the bag mean folded into W2 (assumes fixed, uniform bag size).
    """
    F, H = w1.shape
    C = w2.shape[1]
    w1b = w1.astype(jnp.bfloat16)
    b1r = b1.reshape(1, H).astype(jnp.float32)
    w2s = (w2.astype(jnp.float32) / bag_size)
    w2k = w2s.reshape(1, H) if C == 1 else w2s          # (1, H) row for the VPU path
    b2r = b2.reshape(1, C).astype(jnp.float32)
    return w1b, b1r, w2k, b2r


@jax.jit
def baseline_forward(x, w1b, b1r, w2k, b2r):
    """x: (B, N, F) f32; params from `prepare_params`. Returns (B,) when C == 1."""
    B, N, F = x.shape
    H = w1b.shape[1]
    C = b2r.shape[1]

    # Layout plumbing only — x stays f32, the bf16 cast happens in-kernel.
    x2 = x.reshape(B * N, F)

    vmem = pl.BlockSpec(memory_space=pltpu.MemorySpace.VMEM)
    kernel = functools.partial(baseline_kernel, batch=B, bag=N)

    cost = pl.CostEstimate(
        flops=2 * B * N * F * H + 2 * B * H * C,
        transcendentals=B * C,                                   # sigmoid exp
        bytes_accessed=(B * N * F * 4) + (F * H * 2)             # x f32 + W1 bf16
        + (H + H * C + C) * 4 + (B * C * 4),                     # biases/W2 + out
    )

    probs = pl.pallas_call(
        kernel,
        out_shape=jax.ShapeDtypeStruct((B, C), jnp.float32),
        in_specs=[vmem] * 5,
        out_specs=vmem,
        cost_estimate=cost,
    )(x2, w1b, b1r, w2k, b2r)

    # torch's .squeeze(-1): only squeezes when the trailing dim is 1.
    return probs[:, 0] if C == 1 else probs


def baseline_reference(x, w1, b1, w2, b2):
    """Pure-JAX f32 reference matching the PyTorch module."""
    h = jax.nn.relu(jnp.einsum("bnf,fh->bnh", x, w1) + b1)
    agg = jnp.mean(h, axis=1)
    logits = agg @ w2 + b2
    if w2.shape[1] == 1:
        logits = logits[:, 0]
    return jax.nn.sigmoid(logits)


if __name__ == "__main__":
    # Module defaults: feature_dim=2048, hidden_dim=256, num_classes=1.
    B, N = 2, 8                      # 2 bags, 8 instances per bag
    F, H, C = 2048, 256, 1

    key = jax.random.PRNGKey(0)
    kx, kw1, kb1, kw2, kb2 = jax.random.split(key, 5)

    x = jax.random.normal(kx, (B, N, F), dtype=jnp.float32)
    # Deterministic param init (uniform, roughly matching nn.Linear's scale).
    w1 = jax.random.uniform(kw1, (F, H), jnp.float32, -1.0, 1.0) / jnp.sqrt(F)
    b1 = jax.random.uniform(kb1, (H,), jnp.float32, -1.0, 1.0) / jnp.sqrt(F)
    w2 = jax.random.uniform(kw2, (H, C), jnp.float32, -1.0, 1.0) / jnp.sqrt(H)
    b2 = jax.random.uniform(kb2, (C,), jnp.float32, -1.0, 1.0) / jnp.sqrt(H)

    # One-time parameter prep (bf16 W1, 1/N folded into W2).
    w1b, b1r, w2k, b2r = jax.block_until_ready(prepare_params(w1, b1, w2, b2, N))

    probs = jax.block_until_ready(baseline_forward(x, w1b, b1r, w2k, b2r))
    ref = baseline_reference(x, w1, b1, w2, b2)

    assert probs.shape == (B,), probs.shape
    # Tolerance loosened because W1 is fed to the MXU in bf16 (f32 accumulation).
    assert jnp.allclose(probs, ref, atol=1e-2, rtol=1e-2), (probs, ref)

    print("KERNEL_OK")
</pallas_src>

<mosaic_0001>
module attributes {stable_mosaic.version = 11 : i64} {
  func.func @baseline_kernel(%arg0: memref<16x2048xf32, #tpu.memory_space<vmem>>, %arg1: memref<2048x256xbf16, #tpu.memory_space<vmem>>, %arg2: memref<1x256xf32, #tpu.memory_space<vmem>>, %arg3: memref<1x256xf32, #tpu.memory_space<vmem>>, %arg4: memref<1x1xf32, #tpu.memory_space<vmem>>, %arg5: memref<2x1xf32, #tpu.memory_space<vmem>>) attributes {dimension_semantics = [], scalar_prefetch = 0 : i64, scratch_operands = 0 : i64, tpu.core_type = #tpu.core_type<tc>} {
    %c0 = arith.constant 0 : index
    %c0_0 = arith.constant 0 : index
    %0 = vector.load %arg0[%c0, %c0_0] : memref<16x2048xf32, #tpu.memory_space<vmem>>, vector<16x2048xf32>
    %1 = arith.truncf %0 : vector<16x2048xf32> to vector<16x2048xbf16>
    %c0_1 = arith.constant 0 : index
    %c0_2 = arith.constant 0 : index
    %2 = vector.load %arg1[%c0_1, %c0_2] : memref<2048x256xbf16, #tpu.memory_space<vmem>>, vector<2048x256xbf16>
    %cst = arith.constant dense<0.000000e+00> : vector<16x256xf32>
    %3 = tpu.matmul %1, %2, %cst {dimension_numbers = #tpu.dot_dimension_numbers<[1], [0], [0], [1], [0, 0, 1, 1], [], []>} : vector<16x2048xbf16>, vector<2048x256xbf16>, vector<16x256xf32> -> vector<16x256xf32>
    %c0_3 = arith.constant 0 : index
    %c0_4 = arith.constant 0 : index
    %4 = vector.load %arg2[%c0_3, %c0_4] : memref<1x256xf32, #tpu.memory_space<vmem>>, vector<1x256xf32>
    %5 = vector.broadcast %4 : vector<1x256xf32> to vector<16x256xf32>
    %6 = arith.addf %3, %5 : vector<16x256xf32>
    %cst_5 = arith.constant 0.000000e+00 : f32
    %7 = vector.broadcast %cst_5 : f32 to vector<16x256xf32>
    %8 = arith.maximumf %6, %7 : vector<16x256xf32>
    %9 = vector.shape_cast %8 : vector<16x256xf32> to vector<2x8x256xf32>
    %cst_6 = arith.constant dense<0.000000e+00> : vector<2x256xf32>
    %10 = vector.multi_reduction <add>, %9, %cst_6 [1] : vector<2x8x256xf32> to vector<2x256xf32>
    %c0_7 = arith.constant 0 : index
    %c0_8 = arith.constant 0 : index
    %11 = vector.load %arg3[%c0_7, %c0_8] : memref<1x256xf32, #tpu.memory_space<vmem>>, vector<1x256xf32>
    %12 = vector.broadcast %11 : vector<1x256xf32> to vector<2x256xf32>
    %13 = arith.mulf %10, %12 : vector<2x256xf32>
    %cst_9 = arith.constant dense<0.000000e+00> : vector<2xf32>
    %14 = vector.multi_reduction <add>, %13, %cst_9 [1] : vector<2x256xf32> to vector<2xf32>
    %15 = vector.shape_cast %14 : vector<2xf32> to vector<2x1xf32>
    %c0_10 = arith.constant 0 : index
    %c0_11 = arith.constant 0 : index
    %16 = vector.load %arg4[%c0_10, %c0_11] : memref<1x1xf32, #tpu.memory_space<vmem>>, vector<1x1xf32>
    %17 = vector.broadcast %16 : vector<1x1xf32> to vector<2x1xf32>
    %18 = arith.addf %15, %17 : vector<2x1xf32>
    %19 = arith.negf %18 : vector<2x1xf32>
    %20 = math.exp %19 : vector<2x1xf32>
    %cst_12 = arith.constant 1.000000e+00 : f32
    %21 = vector.broadcast %cst_12 : f32 to vector<2x1xf32>
    %22 = arith.addf %21, %20 : vector<2x1xf32>
    %23 = arith.divf %21, %22 : vector<2x1xf32>
    %c0_13 = arith.constant 0 : index
    %c0_14 = arith.constant 0 : index
    %24 = vector.load %arg5[%c0_13, %c0_14] : memref<2x1xf32, #tpu.memory_space<vmem>>, vector<2x1xf32>
    tpu.vector_store %arg5[%c0_13, %c0_14], %23 {strides = array<i32>} : memref<2x1xf32, #tpu.memory_space<vmem>>, vector<2x1xf32>,
    return
  }
}

</mosaic_0001>

<llo_original>
// kernel: baseline_forward.1
$region0: #{baseline_forward.1}
  #allocation0 [shape = 'u32[]', space=smem, size = 0x4, offset = 0x4, fixed_abs, tag = 'smem constant byte address 0x4 - core index']
  #allocation1 [shape = 'u32[144,128]{1,0:T(1,128)}', space=vmem, size = 0x12000, scoped, tag = 'internal scratch']
  #allocation2 [shape = 'f32[1,1]{1,0:T(1,128)S(1)}', space=vmem, size = 0x200, scoped, tag = 'scoped memory for baseline_forward.1']
  %s0 = inlined_call_operand.hbm [shape: f32[16,2048], index: 0, kind: input, shape index: {}]
  %s1 = inlined_call_operand.hbm [shape: bf16[2048,256], index: 1, kind: input, shape index: {}]
  %s2 = inlined_call_operand.vmem [shape: f32[1,256], index: 2, kind: input, shape index: {}]
  %s3 = inlined_call_operand.vmem [shape: f32[1,256], index: 3, kind: input, shape index: {}]
  %s4 = inlined_call_operand.<no memory space> [shape: f32[1,1], index: 4, kind: input, shape index: {}]
  %s5 = inlined_call_operand.vmem [shape: f32[2,1], index: 5, kind: output, shape index: {}]
  %s6 = sld [smem:[#allocation0]]
  $region38: #{baseline_forward.1} parent=0
    _
  %s8 = ssub.s32 1, %s6
  %s9 = scalar_select 0, %s8, %s6
  %v10 = vstv %s4
  %11 = vst [vmem:[#allocation2] sm:$0x1] %v10
  $region1: #{baseline_forward.1} parent=0
    #allocation3 [shape = 'u8[131072]{0}', space=vmem, size = 0x20000, scoped, tag = 'input window, operand 0, single buffered']
    #allocation4 [shape = 's32[1]{0}', space=sflag, size = 0x4, scoped, tag = 'scoped memory for baseline_forward.1']
    #allocation5 [shape = 'u8[1048576]{0}', space=vmem, size = 0x100000, scoped, tag = 'input window, operand 1, single buffered']
    #allocation6 [shape = 's32[1]{0}', space=sflag, size = 0x4, scoped, tag = 'scoped memory for baseline_forward.1']
    %12 = vsyncpa [#allocation4], 0
    %13 = vsyncpa [#allocation6], 0
    // Predicated region
    $region2: #{baseline_forward.1} parent=1 // pred_check
      _
    $region3: #{baseline_forward.1} parent=1 // pred_check_branch
      %15 = sbr.rel (0) target = $region5
    $region4: #{baseline_forward.1} parent=1 // pred_region
      %s17 = ssub.s32 4096, 4096
      %18 = vsyncadd [#allocation4], %s17
      %s19 = sshll.u32 [#allocation3], 4
      %s20 = int_to_ptr.vmem [resolvable:$true] %s19
      %25 = dma.hbm_to_vmem [thread:$0]  %s0, 4096, %s20, [#allocation4], 2048, 2048, 128
    $region5: #{baseline_forward.1} parent=1 // pred_fallthru
      _
    // Predicated region
    $region6: #{baseline_forward.1} parent=1 // pred_check
      _
    $region7: #{baseline_forward.1} parent=1 // pred_check_branch
      %27 = sbr.rel (0) target = $region9
    $region8: #{baseline_forward.1} parent=1 // pred_region
      %s29 = ssub.s32 32768, 32768
      %30 = vsyncadd [#allocation6], %s29
      %s31 = sshll.u32 [#allocation5], 4
      %s32 = int_to_ptr.vmem [resolvable:$true] %s31
      %37 = dma.hbm_to_vmem [thread:$0]  %s1, 32768, %s32, [#allocation6], 128, 128, 8
    $region9: #{baseline_forward.1} parent=1 // pred_fallthru
      _
    // Predicated region
    $region10: #{baseline_forward.1} parent=1 // pred_check
      _
    $region11: #{baseline_forward.1} parent=1 // pred_check_branch
      %39 = sbr.rel (0) target = $region13
    $region12: #{baseline_forward.1} parent=1 // pred_region
      _
    $region13: #{baseline_forward.1} parent=1 // pred_fallthru
      _
    // Predicated region
    $region14: #{baseline_forward.1} parent=1 // pred_check
      _
    $region15: #{baseline_forward.1} parent=1 // pred_check_branch
      %41 = sbr.rel (0) target = $region17
    $region16: #{baseline_forward.1} parent=1 // pred_region
      _
    $region17: #{baseline_forward.1} parent=1 // pred_fallthru
      _
    // Predicated region
    $region18: #{baseline_forward.1} parent=1 // pred_check
      _
    $region19: #{baseline_forward.1} parent=1 // pred_check_branch
      %43 = sbr.rel (0) target = $region21
    $region20: #{baseline_forward.1} parent=1 // pred_region
      _
    $region21: #{baseline_forward.1} parent=1 // pred_fallthru
      _
    // Predicated region
    $region22: #{baseline_forward.1} parent=1 // pred_check
      _
    $region23: #{baseline_forward.1} parent=1 // pred_check_branch
      %45 = sbr.rel (0) target = $region25
    $region24: #{baseline_forward.1} parent=1 // pred_region
      %46 = dma.done [#allocation4], 4096
    $region25: #{baseline_forward.1} parent=1 // pred_fallthru
      _
    // Predicated region
    $region26: #{baseline_forward.1} parent=1 // pred_check
      _
    $region27: #{baseline_forward.1} parent=1 // pred_check_branch
      %48 = sbr.rel (0) target = $region29
    $region28: #{baseline_forward.1} parent=1 // pred_region
      %49 = dma.done [#allocation6], 32768
    $region29: #{baseline_forward.1} parent=1 // pred_fallthru
      _
    %v50 = vld [vmem:[#allocation3] sm:$0xff]
    %v51 = vld [vmem:[#allocation3 + $0x8] sm:$0xff]
    %v52 = vld [vmem:[#allocation3 + $0x10] sm:$0xff]
    %v53 = vld [vmem:[#allocation3 + $0x18] sm:$0xff]
    %v54 = vld [vmem:[#allocation3 + $0x20] sm:$0xff]
    %v55 = vld [vmem:[#allocation3 + $0x28] sm:$0xff]
    %v56 = vld [vmem:[#allocation3 + $0x30] sm:$0xff]
    %v57 = vld [vmem:[#allocation3 + $0x38] sm:$0xff]
    %v58 = vld [vmem:[#allocation3 + $0x40] sm:$0xff]
    %v59 = vld [vmem:[#allocation3 + $0x48] sm:$0xff]
    %v60 = vld [vmem:[#allocation3 + $0x50] sm:$0xff]
    %v61 = vld [vmem:[#allocation3 + $0x58] sm:$0xff]
    %v62 = vld [vmem:[#allocation3 + $0x60] sm:$0xff]
    %v63 = vld [vmem:[#allocation3 + $0x68] sm:$0xff]
    %v64 = vld [vmem:[#allocation3 + $0x70] sm:$0xff]
    %v65 = vld [vmem:[#allocation3 + $0x78] sm:$0xff]
    %v66 = vld [vmem:[#allocation3 + $0x80] sm:$0xff]
    %v67 = vld [vmem:[#allocation3 + $0x88] sm:$0xff]
    %v68 = vld [vmem:[#allocation3 + $0x90] sm:$0xff]
    %v69 = vld [vmem:[#allocation3 + $0x98] sm:$0xff]
    %v70 = vld [vmem:[#allocation3 + $0xa0] sm:$0xff]
    %v71 = vld [vmem:[#allocation3 + $0xa8] sm:$0xff]
    %v72 = vld [vmem:[#allocation3 + $0xb0] sm:$0xff]
    %v73 = vld [vmem:[#allocation3 + $0xb8] sm:$0xff]
    %v74 = vld [vmem:[#allocation3 + $0xc0] sm:$0xff]
    %v75 = vld [vmem:[#allocation3 + $0xc8] sm:$0xff]
    %v76 = vld [vmem:[#allocation3 + $0xd0] sm:$0xff]
    %v77 = vld [vmem:[#allocation3 + $0xd8] sm:$0xff]
    %v78 = vld [vmem:[#allocation3 + $0xe0] sm:$0xff]
    %v79 = vld [vmem:[#allocation3 + $0xe8] sm:$0xff]
    %v80 = vld [vmem:[#allocation3 + $0xf0] sm:$0xff]
    %v81 = vld [vmem:[#allocation3 + $0xf8] sm:$0xff]
    %v82 = vpack.c.bf16 %v66, %v50
    %v83 = vpack.c.bf16 %v67, %v51
    %v84 = vpack.c.bf16 %v68, %v52
    %v85 = vpack.c.bf16 %v69, %v53
    %v86 = vpack.c.bf16 %v70, %v54
    %v87 = vpack.c.bf16 %v71, %v55
    %v88 = vpack.c.bf16 %v72, %v56
    %v89 = vpack.c.bf16 %v73, %v57
    %v90 = vpack.c.bf16 %v74, %v58
    %v91 = vpack.c.bf16 %v75, %v59
    %v92 = vpack.c.bf16 %v76, %v60
    %v93 = vpack.c.bf16 %v77, %v61
    %v94 = vpack.c.bf16 %v78, %v62
    %v95 = vpack.c.bf16 %v79, %v63
    %v96 = vpack.c.bf16 %v80, %v64
    %v97 = vpack.c.bf16 %v81, %v65
    %v98 = vld [vmem:[#allocation5] sm:$0xff]
    %v99 = vld [vmem:[#allocation5 + $0x8] sm:$0xff]
    %v100 = vld [vmem:[#allocation5 + $0x10] sm:$0xff]
    %v101 = vld [vmem:[#allocation5 + $0x18] sm:$0xff]
    %v102 = vld [vmem:[#allocation5 + $0x20] sm:$0xff]
    %v103 = vld [vmem:[#allocation5 + $0x28] sm:$0xff]
    %v104 = vld [vmem:[#allocation5 + $0x30] sm:$0xff]
    %v105 = vld [vmem:[#allocation5 + $0x38] sm:$0xff]
    %v106 = vld [vmem:[#allocation5 + $0x40] sm:$0xff]
    %v107 = vld [vmem:[#allocation5 + $0x48] sm:$0xff]
    %v108 = vld [vmem:[#allocation5 + $0x50] sm:$0xff]
    %v109 = vld [vmem:[#allocation5 + $0x58] sm:$0xff]
    %v110 = vld [vmem:[#allocation5 + $0x60] sm:$0xff]
    %v111 = vld [vmem:[#allocation5 + $0x68] sm:$0xff]
    %v112 = vld [vmem:[#allocation5 + $0x70] sm:$0xff]
    %v113 = vld [vmem:[#allocation5 + $0x78] sm:$0xff]
    %v114 = vld [vmem:[#allocation5 + $0x80] sm:$0xff]
    %v115 = vld [vmem:[#allocation5 + $0x88] sm:$0xff]
    %v116 = vld [vmem:[#allocation5 + $0x90] sm:$0xff]
    %v117 = vld [vmem:[#allocation5 + $0x98] sm:$0xff]
    %v118 = vld [vmem:[#allocation5 + $0xa0] sm:$0xff]
    %v119 = vld [vmem:[#allocation5 + $0xa8] sm:$0xff]
    %v120 = vld [vmem:[#allocation5 + $0xb0] sm:$0xff]
    %v121 = vld [vmem:[#allocation5 + $0xb8] sm:$0xff]
    %v122 = vld [vmem:[#allocation5 + $0xc0] sm:$0xff]
    %v123 = vld [vmem:[#allocation5 + $0xc8] sm:$0xff]
    %v124 = vld [vmem:[#allocation5 + $0xd0] sm:$0xff]
    %v125 = vld [vmem:[#allocation5 + $0xd8] sm:$0xff]
    %v126 = vld [vmem:[#allocation5 + $0xe0] sm:$0xff]
    %v127 = vld [vmem:[#allocation5 + $0xe8] sm:$0xff]
    %v128 = vld [vmem:[#allocation5 + $0xf0] sm:$0xff]
    %v129 = vld [vmem:[#allocation5 + $0xf8] sm:$0xff]
    %v130 = vld [vmem:[#allocation5 + $0x100] sm:$0xff]
    %v131 = vld [vmem:[#allocation5 + $0x108] sm:$0xff]
    %v132 = vld [vmem:[#allocation5 + $0x110] sm:$0xff]
    %v133 = vld [vmem:[#allocation5 + $0x118] sm:$0xff]
    %v134 = vld [vmem:[#allocation5 + $0x120] sm:$0xff]
    %v135 = vld [vmem:[#allocation5 + $0x128] sm:$0xff]
    %v136 = vld [vmem:[#allocation5 + $0x130] sm:$0xff]
    %v137 = vld [vmem:[#allocation5 + $0x138] sm:$0xff]
    %v138 = vld [vmem:[#allocation5 + $0x140] sm:$0xff]
    %v139 = vld [vmem:[#allocation5 + $0x148] sm:$0xff]
    %v140 = vld [vmem:[#allocation5 + $0x150] sm:$0xff]
    %v141 = vld [vmem:[#allocation5 + $0x158] sm:$0xff]
    %v142 = vld [vmem:[#allocation5 + $0x160] sm:$0xff]
    %v143 = vld [vmem:[#allocation5 + $0x168] sm:$0xff]
    %v144 = vld [vmem:[#allocation5 + $0x170] sm:$0xff]
    %v145 = vld [vmem:[#allocation5 + $0x178] sm:$0xff]
    %v146 = vld [vmem:[#allocation5 + $0x180] sm:$0xff]
    %v147 = vld [vmem:[#allocation5 + $0x188] sm:$0xff]
    %v148 = vld [vmem:[#allocation5 + $0x190] sm:$0xff]
    %v149 = vld [vmem:[#allocation5 + $0x198] sm:$0xff]
    %v150 = vld [vmem:[#allocation5 + $0x1a0] sm:$0xff]
    %v151 = vld [vmem:[#allocation5 + $0x1a8] sm:$0xff]
    %v152 = vld [vmem:[#allocation5 + $0x1b0] sm:$0xff]
    %v153 = vld [vmem:[#allocation5 + $0x1b8] sm:$0xff]
    %v154 = vld [vmem:[#allocation5 + $0x1c0] sm:$0xff]
    %v155 = vld [vmem:[#allocation5 + $0x1c8] sm:$0xff]
    %v156 = vld [vmem:[#allocation5 + $0x1d0] sm:$0xff]
    %v157 = vld [vmem:[#allocation5 + $0x1d8] sm:$0xff]
    %v158 = vld [vmem:[#allocation5 + $0x1e0] sm:$0xff]
    %v159 = vld [vmem:[#allocation5 + $0x1e8] sm:$0xff]
    %v160 = vld [vmem:[#allocation5 + $0x1f0] sm:$0xff]
    %v161 = vld [vmem:[#allocation5 + $0x1f8] sm:$0xff]
    %v162 = vld [vmem:[#allocation5 + $0x200] sm:$0xff]
    %v163 = vld [vmem:[#allocation5 + $0x208] sm:$0xff]
    %v164 = vld [vmem:[#allocation5 + $0x210] sm:$0xff]
    %v165 = vld [vmem:[#allocation5 + $0x218] sm:$0xff]
    %v166 = vld [vmem:[#allocation5 + $0x220] sm:$0xff]
    %v167 = vld [vmem:[#allocation5 + $0x228] sm:$0xff]
    %v168 = vld [vmem:[#allocation5 + $0x230] sm:$0xff]
    %v169 = vld [vmem:[#allocation5 + $0x238] sm:$0xff]
    %v170 = vld [vmem:[#allocation5 + $0x240] sm:$0xff]
    %v171 = vld [vmem:[#allocation5 + $0x248] sm:$0xff]
    %v172 = vld [vmem:[#allocation5 + $0x250] sm:$0xff]
    %v173 = vld [vmem:[#allocation5 + $0x258] sm:$0xff]
    %v174 = vld [vmem:[#allocation5 + $0x260] sm:$0xff]
    %v175 = vld [vmem:[#allocation5 + $0x268] sm:$0xff]
    %v176 = vld [vmem:[#allocation5 + $0x270] sm:$0xff]
    %v177 = vld [vmem:[#allocation5 + $0x278] sm:$0xff]
    %v178 = vld [vmem:[#allocation5 + $0x280] sm:$0xff]
    %v179 = vld [vmem:[#allocation5 + $0x288] sm:$0xff]
    %v180 = vld [vmem:[#allocation5 + $0x290] sm:$0xff]
    %v181 = vld [vmem:[#allocation5 + $0x298] sm:$0xff]
    %v182 = vld [vmem:[#allocation5 + $0x2a0] sm:$0xff]
    %v183 = vld [vmem:[#allocation5 + $0x2a8] sm:$0xff]
    %v184 = vld [vmem:[#allocation5 + $0x2b0] sm:$0xff]
    %v185 = vld [vmem:[#allocation5 + $0x2b8] sm:$0xff]
    %v186 = vld [vmem:[#allocation5 + $0x2c0] sm:$0xff]
    %v187 = vld [vmem:[#allocation5 + $0x2c8] sm:$0xff]
    %v188 = vld [vmem:[#allocation5 + $0x2d0] sm:$0xff]
    %v189 = vld [vmem:[#allocation5 + $0x2d8] sm:$0xff]
    %v190 = vld [vmem:[#allocation5 + $0x2e0] sm:$0xff]
    %v191 = vld [vmem:[#allocation5 + $0x2e8] sm:$0xff]
    %v192 = vld [vmem:[#allocation5 + $0x2f0] sm:$0xff]
    %v193 = vld [vmem:[#allocation5 + $0x2f8] sm:$0xff]
    %v194 = vld [vmem:[#allocation5 + $0x300] sm:$0xff]
    %v195 = vld [vmem:[#allocation5 + $0x308] sm:$0xff]
    %v196 = vld [vmem:[#allocation5 + $0x310] sm:$0xff]
    %v197 = vld [vmem:[#allocation5 + $0x318] sm:$0xff]
    %v198 = vld [vmem:[#allocation5 + $0x320] sm:$0xff]
    %v199 = vld [vmem:[#allocation5 + $0x328] sm:$0xff]
    %v200 = vld [vmem:[#allocation5 + $0x330] sm:$0xff]
    %v201 = vld [vmem:[#allocation5 + $0x338] sm:$0xff]
    %v202 = vld [vmem:[#allocation5 + $0x340] sm:$0xff]
    %v203 = vld [vmem:[#allocation5 + $0x348] sm:$0xff]
    %v204 = vld [vmem:[#allocation5 + $0x350] sm:$0xff]
    %v205 = vld [vmem:[#allocation5 + $0x358] sm:$0xff]
    %v206 = vld [vmem:[#allocation5 + $0x360] sm:$0xff]
    %v207 = vld [vmem:[#allocation5 + $0x368] sm:$0xff]
    %v208 = vld [vmem:[#allocation5 + $0x370] sm:$0xff]
    %v209 = vld [vmem:[#allocation5 + $0x378] sm:$0xff]
    %v210 = vld [vmem:[#allocation5 + $0x380] sm:$0xff]
    %v211 = vld [vmem:[#allocation5 + $0x388] sm:$0xff]
    %v212 = vld [vmem:[#allocation5 + $0x390] sm:$0xff]
    %v213 = vld [vmem:[#allocation5 + $0x398] sm:$0xff]
    %v214 = vld [vmem:[#allocation5 + $0x3a0] sm:$0xff]
    %v215 = vld [vmem:[#allocation5 + $0x3a8] sm:$0xff]
    %v216 = vld [vmem:[#allocation5 + $0x3b0] sm:$0xff]
    %v217 = vld [vmem:[#allocation5 + $0x3b8] sm:$0xff]
    %v218 = vld [vmem:[#allocation5 + $0x3c0] sm:$0xff]
    %v219 = vld [vmem:[#allocation5 + $0x3c8] sm:$0xff]
    %v220 = vld [vmem:[#allocation5 + $0x3d0] sm:$0xff]
    %v221 = vld [vmem:[#allocation5 + $0x3d8] sm:$0xff]
    %v222 = vld [vmem:[#allocation5 + $0x3e0] sm:$0xff]
    %v223 = vld [vmem:[#allocation5 + $0x3e8] sm:$0xff]
    %v224 = vld [vmem:[#allocation5 + $0x3f0] sm:$0xff]
    %v225 = vld [vmem:[#allocation5 + $0x3f8] sm:$0xff]
    %v226 = vld [vmem:[#allocation5 + $0x400] sm:$0xff]
    %v227 = vld [vmem:[#allocation5 + $0x408] sm:$0xff]
    %v228 = vld [vmem:[#allocation5 + $0x410] sm:$0xff]
    %v229 = vld [vmem:[#allocation5 + $0x418] sm:$0xff]
    %v230 = vld [vmem:[#allocation5 + $0x420] sm:$0xff]
    %v231 = vld [vmem:[#allocation5 + $0x428] sm:$0xff]
    %v232 = vld [vmem:[#allocation5 + $0x430] sm:$0xff]
    %v233 = vld [vmem:[#allocation5 + $0x438] sm:$0xff]
    %v234 = vld [vmem:[#allocation5 + $0x440] sm:$0xff]
    %v235 = vld [vmem:[#allocation5 + $0x448] sm:$0xff]
    %v236 = vld [vmem:[#allocation5 + $0x450] sm:$0xff]
    %v237 = vld [vmem:[#allocation5 + $0x458] sm:$0xff]
    %v238 = vld [vmem:[#allocation5 + $0x460] sm:$0xff]
    %v239 = vld [vmem:[#allocation5 + $0x468] sm:$0xff]
    %v240 = vld [vmem:[#allocation5 + $0x470] sm:$0xff]
    %v241 = vld [vmem:[#allocation5 + $0x478] sm:$0xff]
    %v242 = vld [vmem:[#allocation5 + $0x480] sm:$0xff]
    %v243 = vld [vmem:[#allocation5 + $0x488] sm:$0xff]
    %v244 = vld [vmem:[#allocation5 + $0x490] sm:$0xff]
    %v245 = vld [vmem:[#allocation5 + $0x498] sm:$0xff]
    %v246 = vld [vmem:[#allocation5 + $0x4a0] sm:$0xff]
    %v247 = vld [vmem:[#allocation5 + $0x4a8] sm:$0xff]
    %v248 = vld [vmem:[#allocation5 + $0x4b0] sm:$0xff]
    %v249 = vld [vmem:[#allocation5 + $0x4b8] sm:$0xff]
    %v250 = vld [vmem:[#allocation5 + $0x4c0] sm:$0xff]
    %v251 = vld [vmem:[#allocation5 + $0x4c8] sm:$0xff]
    %v252 = vld [vmem:[#allocation5 + $0x4d0] sm:$0xff]
    %v253 = vld [vmem:[#allocation5 + $0x4d8] sm:$0xff]
    %v254 = vld [vmem:[#allocation5 + $0x4e0] sm:$0xff]
    %v255 = vld [vmem:[#allocation5 + $0x4e8] sm:$0xff]
    %v256 = vld [vmem:[#allocation5 + $0x4f0] sm:$0xff]
    %v257 = vld [vmem:[#allocation5 + $0x4f8] sm:$0xff]
    %v258 = vld [vmem:[#allocation5 + $0x500] sm:$0xff]
    %v259 = vld [vmem:[#allocation5 + $0x508] sm:$0xff]
    %v260 = vld [vmem:[#allocation5 + $0x510] sm:$0xff]
    %v261 = vld [vmem:[#allocation5 + $0x518] sm:$0xff]
    %v262 = vld [vmem:[#allocation5 + $0x520] sm:$0xff]
    %v263 = vld [vmem:[#allocation5 + $0x528] sm:$0xff]
    %v264 = vld [vmem:[#allocation5 + $0x530] sm:$0xff]
    %v265 = vld [vmem:[#allocation5 + $0x538] sm:$0xff]
    %v266 = vld [vmem:[#allocation5 + $0x540] sm:$0xff]
    %v267 = vld [vmem:[#allocation5 + $0x548] sm:$0xff]
    %v268 = vld [vmem:[#allocation5 + $0x550] sm:$0xff]
    %v269 = vld [vmem:[#allocation5 + $0x558] sm:$0xff]
    %v270 = vld [vmem:[#allocation5 + $0x560] sm:$0xff]
    %v271 = vld [vmem:[#allocation5 + $0x568] sm:$0xff]
    %v272 = vld [vmem:[#allocation5 + $0x570] sm:$0xff]
    %v273 = vld [vmem:[#allocation5 + $0x578] sm:$0xff]
    %v274 = vld [vmem:[#allocation5 + $0x580] sm:$0xff]
    %v275 = vld [vmem:[#allocation5 + $0x588] sm:$0xff]
    %v276 = vld [vmem:[#allocation5 + $0x590] sm:$0xff]
    %v277 = vld [vmem:[#allocation5 + $0x598] sm:$0xff]
    %v278 = vld [vmem:[#allocation5 + $0x5a0] sm:$0xff]
    %v279 = vld [vmem:[#allocation5 + $0x5a8] sm:$0xff]
    %v280 = vld [vmem:[#allocation5 + $0x5b0] sm:$0xff]
    %v281 = vld [vmem:[#allocation5 + $0x5b8] sm:$0xff]
    %v282 = vld [vmem:[#allocation5 + $0x5c0] sm:$0xff]
    %v283 = vld [vmem:[#allocation5 + $0x5c8] sm:$0xff]
    %v284 = vld [vmem:[#allocation5 + $0x5d0] sm:$0xff]
    %v285 = vld [vmem:[#allocation5 + $0x5d8] sm:$0xff]
    %v286 = vld [vmem:[#allocation5 + $0x5e0] sm:$0xff]
    %v287 = vld [vmem:[#allocation5 + $0x5e8] sm:$0xff]
    %v288 = vld [vmem:[#allocation5 + $0x5f0] sm:$0xff]
    %v289 = vld [vmem:[#allocation5 + $0x5f8] sm:$0xff]
    %v290 = vld [vmem:[#allocation5 + $0x600] sm:$0xff]
    %v291 = vld [vmem:[#allocation5 + $0x608] sm:$0xff]
    %v292 = vld [vmem:[#allocation5 + $0x610] sm:$0xff]
    %v293 = vld [vmem:[#allocation5 + $0x618] sm:$0xff]
    %v294 = vld [vmem:[#allocation5 + $0x620] sm:$0xff]
    %v295 = vld [vmem:[#allocation5 + $0x628] sm:$0xff]
    %v296 = vld [vmem:[#allocation5 + $0x630] sm:$0xff]
    %v297 = vld [vmem:[#allocation5 + $0x638] sm:$0xff]
    %v298 = vld [vmem:[#allocation5 + $0x640] sm:$0xff]
    %v299 = vld [vmem:[#allocation5 + $0x648] sm:$0xff]
    %v300 = vld [vmem:[#allocation5 + $0x650] sm:$0xff]
    %v301 = vld [vmem:[#allocation5 + $0x658] sm:$0xff]
    %v302 = vld [vmem:[#allocation5 + $0x660] sm:$0xff]
    %v303 = vld [vmem:[#allocation5 + $0x668] sm:$0xff]
    %v304 = vld [vmem:[#allocation5 + $0x670] sm:$0xff]
    %v305 = vld [vmem:[#allocation5 + $0x678] sm:$0xff]
    %v306 = vld [vmem:[#allocation5 + $0x680] sm:$0xff]
    %v307 = vld [vmem:[#allocation5 + $0x688] sm:$0xff]
    %v308 = vld [vmem:[#allocation5 + $0x690] sm:$0xff]
    %v309 = vld [vmem:[#allocation5 + $0x698] sm:$0xff]
    %v310 = vld [vmem:[#allocation5 + $0x6a0] sm:$0xff]
    %v311 = vld [vmem:[#allocation5 + $0x6a8] sm:$0xff]
    %v312 = vld [vmem:[#allocation5 + $0x6b0] sm:$0xff]
    %v313 = vld [vmem:[#allocation5 + $0x6b8] sm:$0xff]
    %v314 = vld [vmem:[#allocation5 + $0x6c0] sm:$0xff]
    %v315 = vld [vmem:[#allocation5 + $0x6c8] sm:$0xff]
    %v316 = vld [vmem:[#allocation5 + $0x6d0] sm:$0xff]
    %v317 = vld [vmem:[#allocation5 + $0x6d8] sm:$0xff]
    %v318 = vld [vmem:[#allocation5 + $0x6e0] sm:$0xff]
    %v319 = vld [vmem:[#allocation5 + $0x6e8] sm:$0xff]
    %v320 = vld [vmem:[#allocation5 + $0x6f0] sm:$0xff]
    %v321 = vld [vmem:[#allocation5 + $0x6f8] sm:$0xff]
    %v322 = vld [vmem:[#allocation5 + $0x700] sm:$0xff]
    %v323 = vld [vmem:[#allocation5 + $0x708] sm:$0xff]
    %v324 = vld [vmem:[#allocation5 + $0x710] sm:$0xff]
    %v325 = vld [vmem:[#allocation5 + $0x718] sm:$0xff]
    %v326 = vld [vmem:[#allocation5 + $0x720] sm:$0xff]
    %v327 = vld [vmem:[#allocation5 + $0x728] sm:$0xff]
    %v328 = vld [vmem:[#allocation5 + $0x730] sm:$0xff]
    %v329 = vld [vmem:[#allocation5 + $0x738] sm:$0xff]
    %v330 = vld [vmem:[#allocation5 + $0x740] sm:$0xff]
    %v331 = vld [vmem:[#allocation5 + $0x748] sm:$0xff]
    %v332 = vld [vmem:[#allocation5 + $0x750] sm:$0xff]
    %v333 = vld [vmem:[#allocation5 + $0x758] sm:$0xff]
    %v334 = vld [vmem:[#allocation5 + $0x760] sm:$0xff]
    %v335 = vld [vmem:[#allocation5 + $0x768] sm:$0xff]
    %v336 = vld [vmem:[#allocation5 + $0x770] sm:$0xff]
    %v337 = vld [vmem:[#allocation5 + $0x778] sm:$0xff]
    %v338 = vld [vmem:[#allocation5 + $0x780] sm:$0xff]
    %v339 = vld [vmem:[#allocation5 + $0x788] sm:$0xff]
    %v340 = vld [vmem:[#allocation5 + $0x790] sm:$0xff]
    %v341 = vld [vmem:[#allocation5 + $0x798] sm:$0xff]
    %v342 = vld [vmem:[#allocation5 + $0x7a0] sm:$0xff]
    %v343 = vld [vmem:[#allocation5 + $0x7a8] sm:$0xff]
    %v344 = vld [vmem:[#allocation5 + $0x7b0] sm:$0xff]
    %v345 = vld [vmem:[#allocation5 + $0x7b8] sm:$0xff]
    %v346 = vld [vmem:[#allocation5 + $0x7c0] sm:$0xff]
    %v347 = vld [vmem:[#allocation5 + $0x7c8] sm:$0xff]
    %v348 = vld [vmem:[#allocation5 + $0x7d0] sm:$0xff]
    %v349 = vld [vmem:[#allocation5 + $0x7d8] sm:$0xff]
    %v350 = vld [vmem:[#allocation5 + $0x7e0] sm:$0xff]
    %v351 = vld [vmem:[#allocation5 + $0x7e8] sm:$0xff]
    %v352 = vld [vmem:[#allocation5 + $0x7f0] sm:$0xff]
    %v353 = vld [vmem:[#allocation5 + $0x7f8] sm:$0xff]
    %v354 = vld [vmem:[%s2] sm:$0x3]
    %v356 = vlaneseq
    %v357 = vshrl.u32 %v356, 7
    %v358 = vsub.s32 0, %v357
    %v359 = vrot.slane %v354, %v358
    %v360 = vlaneseq
    %v361 = vshrl.u32 %v360, 7
    %v362 = vsub.s32 1, %v361
    %v363 = vrot.slane %v354, %v362
    %v622 = vunpack.c.l.b16 %v98
    %v623 = vunpack.c.h.b16 %v98
    %v624 = vunpack.c.l.b16 %v99
    %v625 = vunpack.c.h.b16 %v99
    %v626 = vunpack.c.l.b16 %v100
    %v627 = vunpack.c.h.b16 %v100
    %v628 = vunpack.c.l.b16 %v101
    %v629 = vunpack.c.h.b16 %v101
    %v630 = vunpack.c.l.b16 %v102
    %v631 = vunpack.c.h.b16 %v102
    %v632 = vunpack.c.l.b16 %v103
    %v633 = vunpack.c.h.b16 %v103
    %v634 = vunpack.c.l.b16 %v104
    %v635 = vunpack.c.h.b16 %v104
    %v636 = vunpack.c.l.b16 %v105
    %v637 = vunpack.c.h.b16 %v105
    %v638 = vunpack.c.l.b16 %v106
    %v639 = vunpack.c.h.b16 %v106
    %v640 = vunpack.c.l.b16 %v107
    %v641 = vunpack.c.h.b16 %v107
    %v642 = vunpack.c.l.b16 %v108
    %v643 = vunpack.c.h.b16 %v108
    %v644 = vunpack.c.l.b16 %v109
    %v645 = vunpack.c.h.b16 %v109
    %v646 = vunpack.c.l.b16 %v110
    %v647 = vunpack.c.h.b16 %v110
    %v648 = vunpack.c.l.b16 %v111
    %v649 = vunpack.c.h.b16 %v111
    %v650 = vunpack.c.l.b16 %v112
    %v651 = vunpack.c.h.b16 %v112
    %v652 = vunpack.c.l.b16 %v113
    %v653 = vunpack.c.h.b16 %v113
    %v654 = vunpack.c.l.b16 %v114
    %v655 = vunpack.c.h.b16 %v114
    %v656 = vunpack.c.l.b16 %v115
    %v657 = vunpack.c.h.b16 %v115
    %v658 = vunpack.c.l.b16 %v116
    %v659 = vunpack.c.h.b16 %v116
    %v660 = vunpack.c.l.b16 %v117
    %v661 = vunpack.c.h.b16 %v117
    %v662 = vunpack.c.l.b16 %v118
    %v663 = vunpack.c.h.b16 %v118
    %v664 = vunpack.c.l.b16 %v119
    %v665 = vunpack.c.h.b16 %v119
    %v666 = vunpack.c.l.b16 %v120
    %v667 = vunpack.c.h.b16 %v120
    %v668 = vunpack.c.l.b16 %v121
    %v669 = vunpack.c.h.b16 %v121
    %v670 = vunpack.c.l.b16 %v122
    %v671 = vunpack.c.h.b16 %v122
    %v672 = vunpack.c.l.b16 %v123
    %v673 = vunpack.c.h.b16 %v123
    %v674 = vunpack.c.l.b16 %v124
    %v675 = vunpack.c.h.b16 %v124
    %v676 = vunpack.c.l.b16 %v125
    %v677 = vunpack.c.h.b16 %v125
    %v678 = vunpack.c.l.b16 %v126
    %v679 = vunpack.c.h.b16 %v126
    %v680 = vunpack.c.l.b16 %v127
    %v681 = vunpack.c.h.b16 %v127
    %v682 = vunpack.c.l.b16 %v128
    %v683 = vunpack.c.h.b16 %v128
    %v684 = vunpack.c.l.b16 %v129
    %v685 = vunpack.c.h.b16 %v129
    %v686 = vunpack.c.l.b16 %v130
    %v687 = vunpack.c.h.b16 %v130
    %v688 = vunpack.c.l.b16 %v131
    %v689 = vunpack.c.h.b16 %v131
    %v690 = vunpack.c.l.b16 %v132
    %v691 = vunpack.c.h.b16 %v132
    %v692 = vunpack.c.l.b16 %v133
    %v693 = vunpack.c.h.b16 %v133
    %v694 = vunpack.c.l.b16 %v134
    %v695 = vunpack.c.h.b16 %v134
    %v696 = vunpack.c.l.b16 %v135
    %v697 = vunpack.c.h.b16 %v135
    %v698 = vunpack.c.l.b16 %v136
    %v699 = vunpack.c.h.b16 %v136
    %v700 = vunpack.c.l.b16 %v137
    %v701 = vunpack.c.h.b16 %v137
    %v702 = vunpack.c.l.b16 %v138
    %v703 = vunpack.c.h.b16 %v138
    %v704 = vunpack.c.l.b16 %v139
    %v705 = vunpack.c.h.b16 %v139
    %v706 = vunpack.c.l.b16 %v140
    %v707 = vunpack.c.h.b16 %v140
    %v708 = vunpack.c.l.b16 %v141
    %v709 = vunpack.c.h.b16 %v141
    %v710 = vunpack.c.l.b16 %v142
    %v711 = vunpack.c.h.b16 %v142
    %v712 = vunpack.c.l.b16 %v143
    %v713 = vunpack.c.h.b16 %v143
    %v714 = vunpack.c.l.b16 %v144
    %v715 = vunpack.c.h.b16 %v144
    %v716 = vunpack.c.l.b16 %v145
    %v717 = vunpack.c.h.b16 %v145
    %v718 = vunpack.c.l.b16 %v146
    %v719 = vunpack.c.h.b16 %v146
    %v720 = vunpack.c.l.b16 %v147
    %v721 = vunpack.c.h.b16 %v147
    %v722 = vunpack.c.l.b16 %v148
    %v723 = vunpack.c.h.b16 %v148
    %v724 = vunpack.c.l.b16 %v149
    %v725 = vunpack.c.h.b16 %v149
    %v726 = vunpack.c.l.b16 %v150
    %v727 = vunpack.c.h.b16 %v150
    %v728 = vunpack.c.l.b16 %v151
    %v729 = vunpack.c.h.b16 %v151
    %v730 = vunpack.c.l.b16 %v152
    %v731 = vunpack.c.h.b16 %v152
    %v732 = vunpack.c.l.b16 %v153
    %v733 = vunpack.c.h.b16 %v153
    %v734 = vunpack.c.l.b16 %v154
    %v735 = vunpack.c.h.b16 %v154
    %v736 = vunpack.c.l.b16 %v155
    %v737 = vunpack.c.h.b16 %v155
    %v738 = vunpack.c.l.b16 %v156
    %v739 = vunpack.c.h.b16 %v156
    %v740 = vunpack.c.l.b16 %v157
    %v741 = vunpack.c.h.b16 %v157
    %v742 = vunpack.c.l.b16 %v158
    %v743 = vunpack.c.h.b16 %v158
    %v744 = vunpack.c.l.b16 %v159
    %v745 = vunpack.c.h.b16 %v159
    %v746 = vunpack.c.l.b16 %v160
    %v747 = vunpack.c.h.b16 %v160
    %v748 = vunpack.c.l.b16 %v161
    %v749 = vunpack.c.h.b16 %v161
    %v750 = vunpack.c.l.b16 %v162
    %v751 = vunpack.c.h.b16 %v162
    %v752 = vunpack.c.l.b16 %v163
    %v753 = vunpack.c.h.b16 %v163
    %v754 = vunpack.c.l.b16 %v164
    %v755 = vunpack.c.h.b16 %v164
    %v756 = vunpack.c.l.b16 %v165
    %v757 = vunpack.c.h.b16 %v165
    %v758 = vunpack.c.l.b16 %v166
    %v759 = vunpack.c.h.b16 %v166
    %v760 = vunpack.c.l.b16 %v167
    %v761 = vunpack.c.h.b16 %v167
    %v762 = vunpack.c.l.b16 %v168
    %v763 = vunpack.c.h.b16 %v168
    %v764 = vunpack.c.l.b16 %v169
    %v765 = vunpack.c.h.b16 %v169
    %v766 = vunpack.c.l.b16 %v170
    %v767 = vunpack.c.h.b16 %v170
    %v768 = vunpack.c.l.b16 %v171
    %v769 = vunpack.c.h.b16 %v171
    %v770 = vunpack.c.l.b16 %v172
    %v771 = vunpack.c.h.b16 %v172
    %v772 = vunpack.c.l.b16 %v173
    %v773 = vunpack.c.h.b16 %v173
    %v774 = vunpack.c.l.b16 %v174
    %v775 = vunpack.c.h.b16 %v174
    %v776 = vunpack.c.l.b16 %v175
    %v777 = vunpack.c.h.b16 %v175
    %v778 = vunpack.c.l.b16 %v176
    %v779 = vunpack.c.h.b16 %v176
    %v780 = vunpack.c.l.b16 %v177
    %v781 = vunpack.c.h.b16 %v177
    %v782 = vunpack.c.l.b16 %v178
    %v783 = vunpack.c.h.b16 %v178
    %v784 = vunpack.c.l.b16 %v179
    %v785 = vunpack.c.h.b16 %v179
    %v786 = vunpack.c.l.b16 %v180
    %v787 = vunpack.c.h.b16 %v180
    %v788 = vunpack.c.l.b16 %v181
    %v789 = vunpack.c.h.b16 %v181
    %v790 = vunpack.c.l.b16 %v182
    %v791 = vunpack.c.h.b16 %v182
    %v792 = vunpack.c.l.b16 %v183
    %v793 = vunpack.c.h.b16 %v183
    %v794 = vunpack.c.l.b16 %v184
    %v795 = vunpack.c.h.b16 %v184
    %v796 = vunpack.c.l.b16 %v185
    %v797 = vunpack.c.h.b16 %v185
    %v798 = vunpack.c.l.b16 %v186
    %v799 = vunpack.c.h.b16 %v186
    %v800 = vunpack.c.l.b16 %v187
    %v801 = vunpack.c.h.b16 %v187
    %v802 = vunpack.c.l.b16 %v188
    %v803 = vunpack.c.h.b16 %v188
    %v804 = vunpack.c.l.b16 %v189
    %v805 = vunpack.c.h.b16 %v189
    %v806 = vunpack.c.l.b16 %v190
    %v807 = vunpack.c.h.b16 %v190
    %v808 = vunpack.c.l.b16 %v191
    %v809 = vunpack.c.h.b16 %v191
    %v810 = vunpack.c.l.b16 %v192
    %v811 = vunpack.c.h.b16 %v192
    %v812 = vunpack.c.l.b16 %v193
    %v813 = vunpack.c.h.b16 %v193
    %v814 = vunpack.c.l.b16 %v194
    %v815 = vunpack.c.h.b16 %v194
    %v816 = vunpack.c.l.b16 %v195
    %v817 = vunpack.c.h.b16 %v195
    %v818 = vunpack.c.l.b16 %v196
    %v819 = vunpack.c.h.b16 %v196
    %v820 = vunpack.c.l.b16 %v197
    %v821 = vunpack.c.h.b16 %v197
    %v822 = vunpack.c.l.b16 %v198
    %v823 = vunpack.c.h.b16 %v198
    %v824 = vunpack.c.l.b16 %v199
    %v825 = vunpack.c.h.b16 %v199
    %v826 = vunpack.c.l.b16 %v200
    %v827 = vunpack.c.h.b16 %v200
    %v828 = vunpack.c.l.b16 %v201
    %v829 = vunpack.c.h.b16 %v201
    %v830 = vunpack.c.l.b16 %v202
    %v831 = vunpack.c.h.b16 %v202
    %v832 = vunpack.c.l.b16 %v203
    %v833 = vunpack.c.h.b16 %v203
    %v834 = vunpack.c.l.b16 %v204
    %v835 = vunpack.c.h.b16 %v204
    %v836 = vunpack.c.l.b16 %v205
    %v837 = vunpack.c.h.b16 %v205
    %v838 = vunpack.c.l.b16 %v206
    %v839 = vunpack.c.h.b16 %v206
    %v840 = vunpack.c.l.b16 %v207
    %v841 = vunpack.c.h.b16 %v207
    %v842 = vunpack.c.l.b16 %v208
    %v843 = vunpack.c.h.b16 %v208
    %v844 = vunpack.c.l.b16 %v209
    %v845 = vunpack.c.h.b16 %v209
    %v846 = vunpack.c.l.b16 %v210
    %v847 = vunpack.c.h.b16 %v210
    %v848 = vunpack.c.l.b16 %v211
    %v849 = vunpack.c.h.b16 %v211
    %v850 = vunpack.c.l.b16 %v212
    %v851 = vunpack.c.h.b16 %v212
    %v852 = vunpack.c.l.b16 %v213
    %v853 = vunpack.c.h.b16 %v213
    %v854 = vunpack.c.l.b16 %v214
    %v855 = vunpack.c.h.b16 %v214
    %v856 = vunpack.c.l.b16 %v215
    %v857 = vunpack.c.h.b16 %v215
    %v858 = vunpack.c.l.b16 %v216
    %v859 = vunpack.c.h.b16 %v216
    %v860 = vunpack.c.l.b16 %v217
    %v861 = vunpack.c.h.b16 %v217
    %v862 = vunpack.c.l.b16 %v218
    %v863 = vunpack.c.h.b16 %v218
    %v864 = vunpack.c.l.b16 %v219
    %v865 = vunpack.c.h.b16 %v219
    %v866 = vunpack.c.l.b16 %v220
    %v867 = vunpack.c.h.b16 %v220
    %v868 = vunpack.c.l.b16 %v221
    %v869 = vunpack.c.h.b16 %v221
    %v870 = vunpack.c.l.b16 %v222
    %v871 = vunpack.c.h.b16 %v222
    %v872 = vunpack.c.l.b16 %v223
    %v873 = vunpack.c.h.b16 %v223
    %v874 = vunpack.c.l.b16 %v224
    %v875 = vunpack.c.h.b16 %v224
    %v876 = vunpack.c.l.b16 %v225
    %v877 = vunpack.c.h.b16 %v225
    %v878 = vunpack.c.l.b16 %v226
    %v879 = vunpack.c.h.b16 %v226
    %v880 = vunpack.c.l.b16 %v227
    %v881 = vunpack.c.h.b16 %v227
    %v882 = vunpack.c.l.b16 %v228
    %v883 = vunpack.c.h.b16 %v228
    %v884 = vunpack.c.l.b16 %v229
    %v885 = vunpack.c.h.b16 %v229
    %v886 = vunpack.c.l.b16 %v230
    %v887 = vunpack.c.h.b16 %v230
    %v888 = vunpack.c.l.b16 %v231
    %v889 = vunpack.c.h.b16 %v231
    %v890 = vunpack.c.l.b16 %v232
    %v891 = vunpack.c.h.b16 %v232
    %v892 = vunpack.c.l.b16 %v233
    %v893 = vunpack.c.h.b16 %v233
    %v894 = vunpack.c.l.b16 %v234
    %v895 = vunpack.c.h.b16 %v234
    %v896 = vunpack.c.l.b16 %v235
    %v897 = vunpack.c.h.b16 %v235
    %v898 = vunpack.c.l.b16 %v236
    %v899 = vunpack.c.h.b16 %v236
    %v900 = vunpack.c.l.b16 %v237
    %v901 = vunpack.c.h.b16 %v237
    %v902 = vunpack.c.l.b16 %v238
    %v903 = vunpack.c.h.b16 %v238
    %v904 = vunpack.c.l.b16 %v239
    %v905 = vunpack.c.h.b16 %v239
    %v906 = vunpack.c.l.b16 %v240
    %v907 = vunpack.c.h.b16 %v240
    %v908 = vunpack.c.l.b16 %v241
    %v909 = vunpack.c.h.b16 %v241
    %v910 = vunpack.c.l.b16 %v242
    %v911 = vunpack.c.h.b16 %v242
    %v912 = vunpack.c.l.b16 %v243
    %v913 = vunpack.c.h.b16 %v243
    %v914 = vunpack.c.l.b16 %v244
    %v915 = vunpack.c.h.b16 %v244
    %v916 = vunpack.c.l.b16 %v245
    %v917 = vunpack.c.h.b16 %v245
    %v918 = vunpack.c.l.b16 %v246
    %v919 = vunpack.c.h.b16 %v246
    %v920 = vunpack.c.l.b16 %v247
    %v921 = vunpack.c.h.b16 %v247
    %v922 = vunpack.c.l.b16 %v248
    %v923 = vunpack.c.h.b16 %v248
    %v924 = vunpack.c.l.b16 %v249
    %v925 = vunpack.c.h.b16 %v249
    %v926 = vunpack.c.l.b16 %v250
    %v927 = vunpack.c.h.b16 %v250
    %v928 = vunpack.c.l.b16 %v251
    %v929 = vunpack.c.h.b16 %v251
    %v930 = vunpack.c.l.b16 %v252
    %v931 = vunpack.c.h.b16 %v252
    %v932 = vunpack.c.l.b16 %v253
    %v933 = vunpack.c.h.b16 %v253
    %v934 = vunpack.c.l.b16 %v254
    %v935 = vunpack.c.h.b16 %v254
    %v936 = vunpack.c.l.b16 %v255
    %v937 = vunpack.c.h.b16 %v255
    %v938 = vunpack.c.l.b16 %v256
    %v939 = vunpack.c.h.b16 %v256
    %v940 = vunpack.c.l.b16 %v257
    %v941 = vunpack.c.h.b16 %v257
    %v942 = vunpack.c.l.b16 %v258
    %v943 = vunpack.c.h.b16 %v258
    %v944 = vunpack.c.l.b16 %v259
    %v945 = vunpack.c.h.b16 %v259
    %v946 = vunpack.c.l.b16 %v260
    %v947 = vunpack.c.h.b16 %v260
    %v948 = vunpack.c.l.b16 %v261
    %v949 = vunpack.c.h.b16 %v261
    %v950 = vunpack.c.l.b16 %v262
    %v951 = vunpack.c.h.b16 %v262
    %v952 = vunpack.c.l.b16 %v263
    %v953 = vunpack.c.h.b16 %v263
    %v954 = vunpack.c.l.b16 %v264
    %v955 = vunpack.c.h.b16 %v264
    %v956 = vunpack.c.l.b16 %v265
    %v957 = vunpack.c.h.b16 %v265
    %v958 = vunpack.c.l.b16 %v266
    %v959 = vunpack.c.h.b16 %v266
    %v960 = vunpack.c.l.b16 %v267
    %v961 = vunpack.c.h.b16 %v267
    %v962 = vunpack.c.l.b16 %v268
    %v963 = vunpack.c.h.b16 %v268
    %v964 = vunpack.c.l.b16 %v269
    %v965 = vunpack.c.h.b16 %v269
    %v966 = vunpack.c.l.b16 %v270
    %v967 = vunpack.c.h.b16 %v270
    %v968 = vunpack.c.l.b16 %v271
    %v969 = vunpack.c.h.b16 %v271
    %v970 = vunpack.c.l.b16 %v272
    %v971 = vunpack.c.h.b16 %v272
    %v972 = vunpack.c.l.b16 %v273
    %v973 = vunpack.c.h.b16 %v273
    %v974 = vunpack.c.l.b16 %v274
    %v975 = vunpack.c.h.b16 %v274
    %v976 = vunpack.c.l.b16 %v275
    %v977 = vunpack.c.h.b16 %v275
    %v978 = vunpack.c.l.b16 %v276
    %v979 = vunpack.c.h.b16 %v276
    %v980 = vunpack.c.l.b16 %v277
    %v981 = vunpack.c.h.b16 %v277
    %v982 = vunpack.c.l.b16 %v278
    %v983 = vunpack.c.h.b16 %v278
    %v984 = vunpack.c.l.b16 %v279
    %v985 = vunpack.c.h.b16 %v279
    %v986 = vunpack.c.l.b16 %v280
    %v987 = vunpack.c.h.b16 %v280
    %v988 = vunpack.c.l.b16 %v281
    %v989 = vunpack.c.h.b16 %v281
    %v990 = vunpack.c.l.b16 %v282
    %v991 = vunpack.c.h.b16 %v282
    %v992 = vunpack.c.l.b16 %v283
    %v993 = vunpack.c.h.b16 %v283
    %v994 = vunpack.c.l.b16 %v284
    %v995 = vunpack.c.h.b16 %v284
    %v996 = vunpack.c.l.b16 %v285
    %v997 = vunpack.c.h.b16 %v285
    %v998 = vunpack.c.l.b16 %v286
    %v999 = vunpack.c.h.b16 %v286
    %v1000 = vunpack.c.l.b16 %v287
    %v1001 = vunpack.c.h.b16 %v287
    %v1002 = vunpack.c.l.b16 %v288
    %v1003 = vunpack.c.h.b16 %v288
    %v1004 = vunpack.c.l.b16 %v289
    %v1005 = vunpack.c.h.b16 %v289
    %v1006 = vunpack.c.l.b16 %v290
    %v1007 = vunpack.c.h.b16 %v290
    %v1008 = vunpack.c.l.b16 %v291
    %v1009 = vunpack.c.h.b16 %v291
    %v1010 = vunpack.c.l.b16 %v292
    %v1011 = vunpack.c.h.b16 %v292
    %v1012 = vunpack.c.l.b16 %v293
    %v1013 = vunpack.c.h.b16 %v293
    %v1014 = vunpack.c.l.b16 %v294
    %v1015 = vunpack.c.h.b16 %v294
    %v1016 = vunpack.c.l.b16 %v295
    %v1017 = vunpack.c.h.b16 %v295
    %v1018 = vunpack.c.l.b16 %v296
    %v1019 = vunpack.c.h.b16 %v296
    %v1020 = vunpack.c.l.b16 %v297
    %v1021 = vunpack.c.h.b16 %v297
    %v1022 = vunpack.c.l.b16 %v298
    %v1023 = vunpack.c.h.b16 %v298
    %v1024 = vunpack.c.l.b16 %v299
    %v1025 = vunpack.c.h.b16 %v299
    %v1026 = vunpack.c.l.b16 %v300
    %v1027 = vunpack.c.h.b16 %v300
    %v1028 = vunpack.c.l.b16 %v301
    %v1029 = vunpack.c.h.b16 %v301
    %v1030 = vunpack.c.l.b16 %v302
    %v1031 = vunpack.c.h.b16 %v302
    %v1032 = vunpack.c.l.b16 %v303
    %v1033 = vunpack.c.h.b16 %v303
    %v1034 = vunpack.c.l.b16 %v304
    %v1035 = vunpack.c.h.b16 %v304
    %v1036 = vunpack.c.l.b16 %v305
    %v1037 = vunpack.c.h.b16 %v305
    %v1038 = vunpack.c.l.b16 %v306
    %v1039 = vunpack.c.h.b16 %v306
    %v1040 = vunpack.c.l.b16 %v307
    %v1041 = vunpack.c.h.b16 %v307
    %v1042 = vunpack.c.l.b16 %v308
    %v1043 = vunpack.c.h.b16 %v308
    %v1044 = vunpack.c.l.b16 %v309
    %v1045 = vunpack.c.h.b16 %v309
    %v1046 = vunpack.c.l.b16 %v310
    %v1047 = vunpack.c.h.b16 %v310
    %v1048 = vunpack.c.l.b16 %v311
    %v1049 = vunpack.c.h.b16 %v311
    %v1050 = vunpack.c.l.b16 %v312
    %v1051 = vunpack.c.h.b16 %v312
    %v1052 = vunpack.c.l.b16 %v313
    %v1053 = vunpack.c.h.b16 %v313
    %v1054 = vunpack.c.l.b16 %v314
    %v1055 = vunpack.c.h.b16 %v314
    %v1056 = vunpack.c.l.b16 %v315
    %v1057 = vunpack.c.h.b16 %v315
    %v1058 = vunpack.c.l.b16 %v316
    %v1059 = vunpack.c.h.b16 %v316
    %v1060 = vunpack.c.l.b16 %v317
    %v1061 = vunpack.c.h.b16 %v317
    %v1062 = vunpack.c.l.b16 %v318
    %v1063 = vunpack.c.h.b16 %v318
    %v1064 = vunpack.c.l.b16 %v319
    %v1065 = vunpack.c.h.b16 %v319
    %v1066 = vunpack.c.l.b16 %v320
    %v1067 = vunpack.c.h.b16 %v320
    %v1068 = vunpack.c.l.b16 %v321
    %v1069 = vunpack.c.h.b16 %v321
    %v1070 = vunpack.c.l.b16 %v322
    %v1071 = vunpack.c.h.b16 %v322
    %v1072 = vunpack.c.l.b16 %v323
    %v1073 = vunpack.c.h.b16 %v323
    %v1074 = vunpack.c.l.b16 %v324
    %v1075 = vunpack.c.h.b16 %v324
    %v1076 = vunpack.c.l.b16 %v325
    %v1077 = vunpack.c.h.b16 %v325
    %v1078 = vunpack.c.l.b16 %v326
    %v1079 = vunpack.c.h.b16 %v326
    %v1080 = vunpack.c.l.b16 %v327
    %v1081 = vunpack.c.h.b16 %v327
    %v1082 = vunpack.c.l.b16 %v328
    %v1083 = vunpack.c.h.b16 %v328
    %v1084 = vunpack.c.l.b16 %v329
    %v1085 = vunpack.c.h.b16 %v329
    %v1086 = vunpack.c.l.b16 %v330
    %v1087 = vunpack.c.h.b16 %v330
    %v1088 = vunpack.c.l.b16 %v331
    %v1089 = vunpack.c.h.b16 %v331
    %v1090 = vunpack.c.l.b16 %v332
    %v1091 = vunpack.c.h.b16 %v332
    %v1092 = vunpack.c.l.b16 %v333
    %v1093 = vunpack.c.h.b16 %v333
    %v1094 = vunpack.c.l.b16 %v334
    %v1095 = vunpack.c.h.b16 %v334
    %v1096 = vunpack.c.l.b16 %v335
    %v1097 = vunpack.c.h.b16 %v335
    %v1098 = vunpack.c.l.b16 %v336
    %v1099 = vunpack.c.h.b16 %v336
    %v1100 = vunpack.c.l.b16 %v337
    %v1101 = vunpack.c.h.b16 %v337
    %v1102 = vunpack.c.l.b16 %v338
    %v1103 = vunpack.c.h.b16 %v338
    %v1104 = vunpack.c.l.b16 %v339
    %v1105 = vunpack.c.h.b16 %v339
    %v1106 = vunpack.c.l.b16 %v340
    %v1107 = vunpack.c.h.b16 %v340
    %v1108 = vunpack.c.l.b16 %v341
    %v1109 = vunpack.c.h.b16 %v341
    %v1110 = vunpack.c.l.b16 %v342
    %v1111 = vunpack.c.h.b16 %v342
    %v1112 = vunpack.c.l.b16 %v343
    %v1113 = vunpack.c.h.b16 %v343
    %v1114 = vunpack.c.l.b16 %v344
    %v1115 = vunpack.c.h.b16 %v344
    %v1116 = vunpack.c.l.b16 %v345
    %v1117 = vunpack.c.h.b16 %v345
    %v1118 = vunpack.c.l.b16 %v346
    %v1119 = vunpack.c.h.b16 %v346
    %v1120 = vunpack.c.l.b16 %v347
    %v1121 = vunpack.c.h.b16 %v347
    %v1122 = vunpack.c.l.b16 %v348
    %v1123 = vunpack.c.h.b16 %v348
    %v1124 = vunpack.c.l.b16 %v349
    %v1125 = vunpack.c.h.b16 %v349
    %v1126 = vunpack.c.l.b16 %v350
    %v1127 = vunpack.c.h.b16 %v350
    %v1128 = vunpack.c.l.b16 %v351
    %v1129 = vunpack.c.h.b16 %v351
    %v1130 = vunpack.c.l.b16 %v352
    %v1131 = vunpack.c.h.b16 %v352
    %v1132 = vunpack.c.l.b16 %v353
    %v1133 = vunpack.c.h.b16 %v353
    %v1134 = vpack.c.b16 %v624, %v622
    %v1135 = vpack.c.b16 %v625, %v623
    %v1136 = vpack.c.b16 %v628, %v626
    %v1137 = vpack.c.b16 %v629, %v627
    %v1138 = vpack.c.b16 %v632, %v630
    %v1139 = vpack.c.b16 %v633, %v631
    %v1140 = vpack.c.b16 %v636, %v634
    %v1141 = vpack.c.b16 %v637, %v635
    %v1142 = vpack.c.b16 %v640, %v638
    %v1143 = vpack.c.b16 %v641, %v639
    %v1144 = vpack.c.b16 %v644, %v642
    %v1145 = vpack.c.b16 %v645, %v643
    %v1146 = vpack.c.b16 %v648, %v646
    %v1147 = vpack.c.b16 %v649, %v647
    %v1148 = vpack.c.b16 %v652, %v650
    %v1149 = vpack.c.b16 %v653, %v651
    %v1150 = vpack.c.b16 %v656, %v654
    %v1151 = vpack.c.b16 %v657, %v655
    %v1152 = vpack.c.b16 %v660, %v658
    %v1153 = vpack.c.b16 %v661, %v659
    %v1154 = vpack.c.b16 %v664, %v662
    %v1155 = vpack.c.b16 %v665, %v663
    %v1156 = vpack.c.b16 %v668, %v666
    %v1157 = vpack.c.b16 %v669, %v667
    %v1158 = vpack.c.b16 %v672, %v670
    %v1159 = vpack.c.b16 %v673, %v671
    %v1160 = vpack.c.b16 %v676, %v674
    %v1161 = vpack.c.b16 %v677, %v675
    %v1162 = vpack.c.b16 %v680, %v678
    %v1163 = vpack.c.b16 %v681, %v679
    %v1164 = vpack.c.b16 %v684, %v682
    %v1165 = vpack.c.b16 %v685, %v683
    %v1166 = vpack.c.b16 %v688, %v686
    %v1167 = vpack.c.b16 %v689, %v687
    %v1168 = vpack.c.b16 %v692, %v690
    %v1169 = vpack.c.b16 %v693, %v691
    %v1170 = vpack.c.b16 %v696, %v694
    %v1171 = vpack.c.b16 %v697, %v695
    %v1172 = vpack.c.b16 %v700, %v698
    %v1173 = vpack.c.b16 %v701, %v699
    %v1174 = vpack.c.b16 %v704, %v702
    %v1175 = vpack.c.b16 %v705, %v703
    %v1176 = vpack.c.b16 %v708, %v706
    %v1177 = vpack.c.b16 %v709, %v707
    %v1178 = vpack.c.b16 %v712, %v710
    %v1179 = vpack.c.b16 %v713, %v711
    %v1180 = vpack.c.b16 %v716, %v714
    %v1181 = vpack.c.b16 %v717, %v715
    %v1182 = vpack.c.b16 %v720, %v718
    %v1183 = vpack.c.b16 %v721, %v719
    %v1184 = vpack.c.b16 %v724, %v722
    %v1185 = vpack.c.b16 %v725, %v723
    %v1186 = vpack.c.b16 %v728, %v726
    %v1187 = vpack.c.b16 %v729, %v727
    %v1188 = vpack.c.b16 %v732, %v730
    %v1189 = vpack.c.b16 %v733, %v731
    %v1190 = vpack.c.b16 %v736, %v734
    %v1191 = vpack.c.b16 %v737, %v735
    %v1192 = vpack.c.b16 %v740, %v738
    %v1193 = vpack.c.b16 %v741, %v739
    %v1194 = vpack.c.b16 %v744, %v742
    %v1195 = vpack.c.b16 %v745, %v743
    %v1196 = vpack.c.b16 %v748, %v746
    %v1197 = vpack.c.b16 %v749, %v747
    %v1198 = vpack.c.b16 %v752, %v750
    %v1199 = vpack.c.b16 %v753, %v751
    %v1200 = vpack.c.b16 %v756, %v754
    %v1201 = vpack.c.b16 %v757, %v755
    %v1202 = vpack.c.b16 %v760, %v758
    %v1203 = vpack.c.b16 %v761, %v759
    %v1204 = vpack.c.b16 %v764, %v762
    %v1205 = vpack.c.b16 %v765, %v763
    %v1206 = vpack.c.b16 %v768, %v766
    %v1207 = vpack.c.b16 %v769, %v767
    %v1208 = vpack.c.b16 %v772, %v770
    %v1209 = vpack.c.b16 %v773, %v771
    %v1210 = vpack.c.b16 %v776, %v774
    %v1211 = vpack.c.b16 %v777, %v775
    %v1212 = vpack.c.b16 %v780, %v778
    %v1213 = vpack.c.b16 %v781, %v779
    %v1214 = vpack.c.b16 %v784, %v782
    %v1215 = vpack.c.b16 %v785, %v783
    %v1216 = vpack.c.b16 %v788, %v786
    %v1217 = vpack.c.b16 %v789, %v787
    %v1218 = vpack.c.b16 %v792, %v790
    %v1219 = vpack.c.b16 %v793, %v791
    %v1220 = vpack.c.b16 %v796, %v794
    %v1221 = vpack.c.b16 %v797, %v795
    %v1222 = vpack.c.b16 %v800, %v798
    %v1223 = vpack.c.b16 %v801, %v799
    %v1224 = vpack.c.b16 %v804, %v802
    %v1225 = vpack.c.b16 %v805, %v803
    %v1226 = vpack.c.b16 %v808, %v806
    %v1227 = vpack.c.b16 %v809, %v807
    %v1228 = vpack.c.b16 %v812, %v810
    %v1229 = vpack.c.b16 %v813, %v811
    %v1230 = vpack.c.b16 %v816, %v814
    %v1231 = vpack.c.b16 %v817, %v815
    %v1232 = vpack.c.b16 %v820, %v818
    %v1233 = vpack.c.b16 %v821, %v819
    %v1234 = vpack.c.b16 %v824, %v822
    %v1235 = vpack.c.b16 %v825, %v823
    %v1236 = vpack.c.b16 %v828, %v826
    %v1237 = vpack.c.b16 %v829, %v827
    %v1238 = vpack.c.b16 %v832, %v830
    %v1239 = vpack.c.b16 %v833, %v831
    %v1240 = vpack.c.b16 %v836, %v834
    %v1241 = vpack.c.b16 %v837, %v835
    %v1242 = vpack.c.b16 %v840, %v838
    %v1243 = vpack.c.b16 %v841, %v839
    %v1244 = vpack.c.b16 %v844, %v842
    %v1245 = vpack.c.b16 %v845, %v843
    %v1246 = vpack.c.b16 %v848, %v846
    %v1247 = vpack.c.b16 %v849, %v847
    %v1248 = vpack.c.b16 %v852, %v850
    %v1249 = vpack.c.b16 %v853, %v851
    %v1250 = vpack.c.b16 %v856, %v854
    %v1251 = vpack.c.b16 %v857, %v855
    %v1252 = vpack.c.b16 %v860, %v858
    %v1253 = vpack.c.b16 %v861, %v859
    %v1254 = vpack.c.b16 %v864, %v862
    %v1255 = vpack.c.b16 %v865, %v863
    %v1256 = vpack.c.b16 %v868, %v866
    %v1257 = vpack.c.b16 %v869, %v867
    %v1258 = vpack.c.b16 %v872, %v870
    %v1259 = vpack.c.b16 %v873, %v871
    %v1260 = vpack.c.b16 %v876, %v874
    %v1261 = vpack.c.b16 %v877, %v875
    %v1262 = vpack.c.b16 %v880, %v878
    %v1263 = vpack.c.b16 %v881, %v879
    %v1264 = vpack.c.b16 %v884, %v882
    %v1265 = vpack.c.b16 %v885, %v883
    %v1266 = vpack.c.b16 %v888, %v886
    %v1267 = vpack.c.b16 %v889, %v887
    %v1268 = vpack.c.b16 %v892, %v890
    %v1269 = vpack.c.b16 %v893, %v891
    %v1270 = vpack.c.b16 %v896, %v894
    %v1271 = vpack.c.b16 %v897, %v895
    %v1272 = vpack.c.b16 %v900, %v898
    %v1273 = vpack.c.b16 %v901, %v899
    %v1274 = vpack.c.b16 %v904, %v902
    %v1275 = vpack.c.b16 %v905, %v903
    %v1276 = vpack.c.b16 %v908, %v906
    %v1277 = vpack.c.b16 %v909, %v907
    %v1278 = vpack.c.b16 %v912, %v910
    %v1279 = vpack.c.b16 %v913, %v911
    %v1280 = vpack.c.b16 %v916, %v914
    %v1281 = vpack.c.b16 %v917, %v915
    %v1282 = vpack.c.b16 %v920, %v918
    %v1283 = vpack.c.b16 %v921, %v919
    %v1284 = vpack.c.b16 %v924, %v922
    %v1285 = vpack.c.b16 %v925, %v923
    %v1286 = vpack.c.b16 %v928, %v926
    %v1287 = vpack.c.b16 %v929, %v927
    %v1288 = vpack.c.b16 %v932, %v930
    %v1289 = vpack.c.b16 %v933, %v931
    %v1290 = vpack.c.b16 %v936, %v934
    %v1291 = vpack.c.b16 %v937, %v935
    %v1292 = vpack.c.b16 %v940, %v938
    %v1293 = vpack.c.b16 %v941, %v939
    %v1294 = vpack.c.b16 %v944, %v942
    %v1295 = vpack.c.b16 %v945, %v943
    %v1296 = vpack.c.b16 %v948, %v946
    %v1297 = vpack.c.b16 %v949, %v947
    %v1298 = vpack.c.b16 %v952, %v950
    %v1299 = vpack.c.b16 %v953, %v951
    %v1300 = vpack.c.b16 %v956, %v954
    %v1301 = vpack.c.b16 %v957, %v955
    %v1302 = vpack.c.b16 %v960, %v958
    %v1303 = vpack.c.b16 %v961, %v959
    %v1304 = vpack.c.b16 %v964, %v962
    %v1305 = vpack.c.b16 %v965, %v963
    %v1306 = vpack.c.b16 %v968, %v966
    %v1307 = vpack.c.b16 %v969, %v967
    %v1308 = vpack.c.b16 %v972, %v970
    %v1309 = vpack.c.b16 %v973, %v971
    %v1310 = vpack.c.b16 %v976, %v974
    %v1311 = vpack.c.b16 %v977, %v975
    %v1312 = vpack.c.b16 %v980, %v978
    %v1313 = vpack.c.b16 %v981, %v979
    %v1314 = vpack.c.b16 %v984, %v982
    %v1315 = vpack.c.b16 %v985, %v983
    %v1316 = vpack.c.b16 %v988, %v986
    %v1317 = vpack.c.b16 %v989, %v987
    %v1318 = vpack.c.b16 %v992, %v990
    %v1319 = vpack.c.b16 %v993, %v991
    %v1320 = vpack.c.b16 %v996, %v994
    %v1321 = vpack.c.b16 %v997, %v995
    %v1322 = vpack.c.b16 %v1000, %v998
    %v1323 = vpack.c.b16 %v1001, %v999
    %v1324 = vpack.c.b16 %v1004, %v1002
    %v1325 = vpack.c.b16 %v1005, %v1003
    %v1326 = vpack.c.b16 %v1008, %v1006
    %v1327 = vpack.c.b16 %v1009, %v1007
    %v1328 = vpack.c.b16 %v1012, %v1010
    %v1329 = vpack.c.b16 %v1013, %v1011
    %v1330 = vpack.c.b16 %v1016, %v1014
    %v1331 = vpack.c.b16 %v1017, %v1015
    %v1332 = vpack.c.b16 %v1020, %v1018
    %v1333 = vpack.c.b16 %v1021, %v1019
    %v1334 = vpack.c.b16 %v1024, %v1022
    %v1335 = vpack.c.b16 %v1025, %v1023
    %v1336 = vpack.c.b16 %v1028, %v1026
    %v1337 = vpack.c.b16 %v1029, %v1027
    %v1338 = vpack.c.b16 %v1032, %v1030
    %v1339 = vpack.c.b16 %v1033, %v1031
    %v1340 = vpack.c.b16 %v1036, %v1034
    %v1341 = vpack.c.b16 %v1037, %v1035
    %v1342 = vpack.c.b16 %v1040, %v1038
    %v1343 = vpack.c.b16 %v1041, %v1039
    %v1344 = vpack.c.b16 %v1044, %v1042
    %v1345 = vpack.c.b16 %v1045, %v1043
    %v1346 = vpack.c.b16 %v1048, %v1046
    %v1347 = vpack.c.b16 %v1049, %v1047
    %v1348 = vpack.c.b16 %v1052, %v1050
    %v1349 = vpack.c.b16 %v1053, %v1051
    %v1350 = vpack.c.b16 %v1056, %v1054
    %v1351 = vpack.c.b16 %v1057, %v1055
    %v1352 = vpack.c.b16 %v1060, %v1058
    %v1353 = vpack.c.b16 %v1061, %v1059
    %v1354 = vpack.c.b16 %v1064, %v1062
    %v1355 = vpack.c.b16 %v1065, %v1063
    %v1356 = vpack.c.b16 %v1068, %v1066
    %v1357 = vpack.c.b16 %v1069, %v1067
    %v1358 = vpack.c.b16 %v1072, %v1070
    %v1359 = vpack.c.b16 %v1073, %v1071
    %v1360 = vpack.c.b16 %v1076, %v1074
    %v1361 = vpack.c.b16 %v1077, %v1075
    %v1362 = vpack.c.b16 %v1080, %v1078
    %v1363 = vpack.c.b16 %v1081, %v1079
    %v1364 = vpack.c.b16 %v1084, %v1082
    %v1365 = vpack.c.b16 %v1085, %v1083
    %v1366 = vpack.c.b16 %v1088, %v1086
    %v1367 = vpack.c.b16 %v1089, %v1087
    %v1368 = vpack.c.b16 %v1092, %v1090
    %v1369 = vpack.c.b16 %v1093, %v1091
    %v1370 = vpack.c.b16 %v1096, %v1094
    %v1371 = vpack.c.b16 %v1097, %v1095
    %v1372 = vpack.c.b16 %v1100, %v1098
    %v1373 = vpack.c.b16 %v1101, %v1099
    %v1374 = vpack.c.b16 %v1104, %v1102
    %v1375 = vpack.c.b16 %v1105, %v1103
    %v1376 = vpack.c.b16 %v1108, %v1106
    %v1377 = vpack.c.b16 %v1109, %v1107
    %v1378 = vpack.c.b16 %v1112, %v1110
    %v1379 = vpack.c.b16 %v1113, %v1111
    %v1380 = vpack.c.b16 %v1116, %v1114
    %v1381 = vpack.c.b16 %v1117, %v1115
    %v1382 = vpack.c.b16 %v1120, %v1118
    %v1383 = vpack.c.b16 %v1121, %v1119
    %v1384 = vpack.c.b16 %v1124, %v1122
    %v1385 = vpack.c.b16 %v1125, %v1123
    %v1386 = vpack.c.b16 %v1128, %v1126
    %v1387 = vpack.c.b16 %v1129, %v1127
    %v1388 = vpack.c.b16 %v1132, %v1130
    %v1389 = vpack.c.b16 %v1133, %v1131
    %1646 = vmatprep.subr.bf16.mxu0 %v1149
    %1647 = vmatpush1.bf16.msra.mxu0 %v1148
    %1648 = vmatprep.subr.bf16.mxu0 %v1147
    %1649 = vmatpush1.bf16.msra.mxu0 %v1146
    %1650 = vmatprep.subr.bf16.mxu0 %v1145
    %1651 = vmatpush1.bf16.msra.mxu0 %v1144
    %1652 = vmatprep.subr.bf16.mxu0 %v1143
    %1653 = vmatpush1.bf16.msra.mxu0 %v1142
    %1654 = vmatprep.subr.bf16.mxu0 %v1141
    %1655 = vmatpush1.bf16.msra.mxu0 %v1140
    %1656 = vmatprep.subr.bf16.mxu0 %v1139
    %1657 = vmatpush1.bf16.msra.mxu0 %v1138
    %1658 = vmatprep.subr.bf16.mxu0 %v1137
    %1659 = vmatpush1.bf16.msra.mxu0 %v1136
    %1660 = vmatprep.subr.bf16.mxu0 %v1135
    %1661 = vmatpush1.bf16.msra.mxu0 %v1134
    %1662 = vmatprep.subr.bf16.mxu0 %v1165
    %1663 = vmatpush2.bf16.msra.mxu0 %v1164
    %1664 = vmatprep.subr.bf16.mxu0 %v1163
    %1665 = vmatpush2.bf16.msra.mxu0 %v1162
    %1666 = vmatprep.subr.bf16.mxu0 %v1161
    %1667 = vmatpush2.bf16.msra.mxu0 %v1160
    %1668 = vmatprep.subr.bf16.mxu0 %v1159
    %1669 = vmatpush2.bf16.msra.mxu0 %v1158
    %1670 = vmatprep.subr.bf16.mxu0 %v1157
    %1671 = vmatpush2.bf16.msra.mxu0 %v1156
    %1672 = vmatprep.subr.bf16.mxu0 %v1155
    %1673 = vmatpush2.bf16.msra.mxu0 %v1154
    %1674 = vmatprep.subr.bf16.mxu0 %v1153
    %1675 = vmatpush2.bf16.msra.mxu0 %v1152
    %1676 = vmatprep.subr.bf16.mxu0 %v1151
    %1677 = vmatpush2.bf16.msra.mxu0 %v1150
    %1678 = vmatprep.mubr.bf16.mxu0 %v83
    %1679 = vmatmul.mubr.bf16.gmra.mxu0 %v82
    %v1680 = vpop.f32.mrf.mxu0
    %v1681 = vadd.f32 %v359, %v1680
    %v1682 = vpop.f32.mrf.mxu0
    %v1683 = vadd.f32 %v363, %v1682
    %v1684 = vpop.f32.mrf.mxu0
    %v1685 = vadd.f32 %v359, %v1684
    %v1686 = vpop.f32.mrf.mxu0
    %v1687 = vadd.f32 %v363, %v1686
    %1688 = vdwg.mxu0
    %1689 = vmatprep.subr.bf16.mxu0 %v1181
    %1690 = vmatpush1.bf16.msra.mxu0 %v1180
    %1691 = vmatprep.subr.bf16.mxu0 %v1179
    %1692 = vmatpush1.bf16.msra.mxu0 %v1178
    %1693 = vmatprep.subr.bf16.mxu0 %v1177
    %1694 = vmatpush1.bf16.msra.mxu0 %v1176
    %1695 = vmatprep.subr.bf16.mxu0 %v1175
    %1696 = vmatpush1.bf16.msra.mxu0 %v1174
    %1697 = vmatprep.subr.bf16.mxu0 %v1173
    %1698 = vmatpush1.bf16.msra.mxu0 %v1172
    %1699 = vmatprep.subr.bf16.mxu0 %v1171
    %1700 = vmatpush1.bf16.msra.mxu0 %v1170
    %1701 = vmatprep.subr.bf16.mxu0 %v1169
    %1702 = vmatpush1.bf16.msra.mxu0 %v1168
    %1703 = vmatprep.subr.bf16.mxu0 %v1167
    %1704 = vmatpush1.bf16.msra.mxu0 %v1166
    %1705 = vmatprep.subr.bf16.mxu0 %v1197
    %1706 = vmatpush2.bf16.msra.mxu0 %v1196
    %1707 = vmatprep.subr.bf16.mxu0 %v1195
    %1708 = vmatpush2.bf16.msra.mxu0 %v1194
    %1709 = vmatprep.subr.bf16.mxu0 %v1193
    %1710 = vmatpush2.bf16.msra.mxu0 %v1192
    %1711 = vmatprep.subr.bf16.mxu0 %v1191
    %1712 = vmatpush2.bf16.msra.mxu0 %v1190
    %1713 = vmatprep.subr.bf16.mxu0 %v1189
    %1714 = vmatpush2.bf16.msra.mxu0 %v1188
    %1715 = vmatprep.subr.bf16.mxu0 %v1187
    %1716 = vmatpush2.bf16.msra.mxu0 %v1186
    %1717 = vmatprep.subr.bf16.mxu0 %v1185
    %1718 = vmatpush2.bf16.msra.mxu0 %v1184
    %1719 = vmatprep.subr.bf16.mxu0 %v1183
    %1720 = vmatpush2.bf16.msra.mxu0 %v1182
    %1721 = vmatprep.mubr.bf16.mxu0 %v85
    %1722 = vmatmul.mubr.bf16.gmra.mxu0 %v84
    %v1723 = vpop.f32.mrf.mxu0
    %v1724 = vadd.f32 %v1681, %v1723
    %v1725 = vpop.f32.mrf.mxu0
    %v1726 = vadd.f32 %v1683, %v1725
    %v1727 = vpop.f32.mrf.mxu0
    %v1728 = vadd.f32 %v1685, %v1727
    %v1729 = vpop.f32.mrf.mxu0
    %v1730 = vadd.f32 %v1687, %v1729
    %1731 = vdwg.mxu0
    %1732 = vmatprep.subr.bf16.mxu0 %v1213
    %1733 = vmatpush1.bf16.msra.mxu0 %v1212
    %1734 = vmatprep.subr.bf16.mxu0 %v1211
    %1735 = vmatpush1.bf16.msra.mxu0 %v1210
    %1736 = vmatprep.subr.bf16.mxu0 %v1209
    %1737 = vmatpush1.bf16.msra.mxu0 %v1208
    %1738 = vmatprep.subr.bf16.mxu0 %v1207
    %1739 = vmatpush1.bf16.msra.mxu0 %v1206
    %1740 = vmatprep.subr.bf16.mxu0 %v1205
    %1741 = vmatpush1.bf16.msra.mxu0 %v1204
    %1742 = vmatprep.subr.bf16.mxu0 %v1203
    %1743 = vmatpush1.bf16.msra.mxu0 %v1202
    %1744 = vmatprep.subr.bf16.mxu0 %v1201
    %1745 = vmatpush1.bf16.msra.mxu0 %v1200
    %1746 = vmatprep.subr.bf16.mxu0 %v1199
    %1747 = vmatpush1.bf16.msra.mxu0 %v1198
    %1748 = vmatprep.subr.bf16.mxu0 %v1229
    %1749 = vmatpush2.bf16.msra.mxu0 %v1228
    %1750 = vmatprep.subr.bf16.mxu0 %v1227
    %1751 = vmatpush2.bf16.msra.mxu0 %v1226
    %1752 = vmatprep.subr.bf16.mxu0 %v1225
    %1753 = vmatpush2.bf16.msra.mxu0 %v1224
    %1754 = vmatprep.subr.bf16.mxu0 %v1223
    %1755 = vmatpush2.bf16.msra.mxu0 %v1222
    %1756 = vmatprep.subr.bf16.mxu0 %v1221
    %1757 = vmatpush2.bf16.msra.mxu0 %v1220
    %1758 = vmatprep.subr.bf16.mxu0 %v1219
    %1759 = vmatpush2.bf16.msra.mxu0 %v1218
    %1760 = vmatprep.subr.bf16.mxu0 %v1217
    %1761 = vmatpush2.bf16.msra.mxu0 %v1216
    %1762 = vmatprep.subr.bf16.mxu0 %v1215
    %1763 = vmatpush2.bf16.msra.mxu0 %v1214
    %1764 = vmatprep.mubr.bf16.mxu0 %v87
    %1765 = vmatmul.mubr.bf16.gmra.mxu0 %v86
    %v1766 = vpop.f32.mrf.mxu0
    %v1767 = vadd.f32 %v1724, %v1766
    %v1768 = vpop.f32.mrf.mxu0
    %v1769 = vadd.f32 %v1726, %v1768
    %v1770 = vpop.f32.mrf.mxu0
    %v1771 = vadd.f32 %v1728, %v1770
    %v1772 = vpop.f32.mrf.mxu0
    %v1773 = vadd.f32 %v1730, %v1772
    %1774 = vdwg.mxu0
    %1775 = vmatprep.subr.bf16.mxu0 %v1245
    %1776 = vmatpush1.bf16.msra.mxu0 %v1244
    %1777 = vmatprep.subr.bf16.mxu0 %v1243
    %1778 = vmatpush1.bf16.msra.mxu0 %v1242
    %1779 = vmatprep.subr.bf16.mxu0 %v1241
    %1780 = vmatpush1.bf16.msra.mxu0 %v1240
    %1781 = vmatprep.subr.bf16.mxu0 %v1239
    %1782 = vmatpush1.bf16.msra.mxu0 %v1238
    %1783 = vmatprep.subr.bf16.mxu0 %v1237
    %1784 = vmatpush1.bf16.msra.mxu0 %v1236
    %1785 = vmatprep.subr.bf16.mxu0 %v1235
    %1786 = vmatpush1.bf16.msra.mxu0 %v1234
    %1787 = vmatprep.subr.bf16.mxu0 %v1233
    %1788 = vmatpush1.bf16.msra.mxu0 %v1232
    %1789 = vmatprep.subr.bf16.mxu0 %v1231
    %1790 = vmatpush1.bf16.msra.mxu0 %v1230
    %1791 = vmatprep.subr.bf16.mxu0 %v1261
    %1792 = vmatpush2.bf16.msra.mxu0 %v1260
    %1793 = vmatprep.subr.bf16.mxu0 %v1259
    %1794 = vmatpush2.bf16.msra.mxu0 %v1258
    %1795 = vmatprep.subr.bf16.mxu0 %v1257
    %1796 = vmatpush2.bf16.msra.mxu0 %v1256
    %1797 = vmatprep.subr.bf16.mxu0 %v1255
    %1798 = vmatpush2.bf16.msra.mxu0 %v1254
    %1799 = vmatprep.subr.bf16.mxu0 %v1253
    %1800 = vmatpush2.bf16.msra.mxu0 %v1252
    %1801 = vmatprep.subr.bf16.mxu0 %v1251
    %1802 = vmatpush2.bf16.msra.mxu0 %v1250
    %1803 = vmatprep.subr.bf16.mxu0 %v1249
    %1804 = vmatpush2.bf16.msra.mxu0 %v1248
    %1805 = vmatprep.subr.bf16.mxu0 %v1247
    %1806 = vmatpush2.bf16.msra.mxu0 %v1246
    %1807 = vmatprep.mubr.bf16.mxu0 %v89
    %1808 = vmatmul.mubr.bf16.gmra.mxu0 %v88
    %v1809 = vpop.f32.mrf.mxu0
    %v1810 = vadd.f32 %v1767, %v1809
    %v1811 = vpop.f32.mrf.mxu0
    %v1812 = vadd.f32 %v1769, %v1811
    %v1813 = vpop.f32.mrf.mxu0
    %v1814 = vadd.f32 %v1771, %v1813
    %v1815 = vpop.f32.mrf.mxu0
    %v1816 = vadd.f32 %v1773, %v1815
    %1817 = vdwg.mxu0
    %1818 = vmatprep.subr.bf16.mxu0 %v1277
    %1819 = vmatpush1.bf16.msra.mxu0 %v1276
    %1820 = vmatprep.subr.bf16.mxu0 %v1275
    %1821 = vmatpush1.bf16.msra.mxu0 %v1274
    %1822 = vmatprep.subr.bf16.mxu0 %v1273
    %1823 = vmatpush1.bf16.msra.mxu0 %v1272
    %1824 = vmatprep.subr.bf16.mxu0 %v1271
    %1825 = vmatpush1.bf16.msra.mxu0 %v1270
    %1826 = vmatprep.subr.bf16.mxu0 %v1269
    %1827 = vmatpush1.bf16.msra.mxu0 %v1268
    %1828 = vmatprep.subr.bf16.mxu0 %v1267
    %1829 = vmatpush1.bf16.msra.mxu0 %v1266
    %1830 = vmatprep.subr.bf16.mxu0 %v1265
    %1831 = vmatpush1.bf16.msra.mxu0 %v1264
    %1832 = vmatprep.subr.bf16.mxu0 %v1263
    %1833 = vmatpush1.bf16.msra.mxu0 %v1262
    %1834 = vmatprep.subr.bf16.mxu0 %v1293
    %1835 = vmatpush2.bf16.msra.mxu0 %v1292
    %1836 = vmatprep.subr.bf16.mxu0 %v1291
    %1837 = vmatpush2.bf16.msra.mxu0 %v1290
    %1838 = vmatprep.subr.bf16.mxu0 %v1289
    %1839 = vmatpush2.bf16.msra.mxu0 %v1288
    %1840 = vmatprep.subr.bf16.mxu0 %v1287
    %1841 = vmatpush2.bf16.msra.mxu0 %v1286
    %1842 = vmatprep.subr.bf16.mxu0 %v1285
    %1843 = vmatpush2.bf16.msra.mxu0 %v1284
    %1844 = vmatprep.subr.bf16.mxu0 %v1283
    %1845 = vmatpush2.bf16.msra.mxu0 %v1282
    %1846 = vmatprep.subr.bf16.mxu0 %v1281
    %1847 = vmatpush2.bf16.msra.mxu0 %v1280
    %1848 = vmatprep.subr.bf16.mxu0 %v1279
    %1849 = vmatpush2.bf16.msra.mxu0 %v1278
    %1850 = vmatprep.mubr.bf16.mxu0 %v91
    %1851 = vmatmul.mubr.bf16.gmra.mxu0 %v90
    %v1852 = vpop.f32.mrf.mxu0
    %v1853 = vadd.f32 %v1810, %v1852
    %v1854 = vpop.f32.mrf.mxu0
    %v1855 = vadd.f32 %v1812, %v1854
    %v1856 = vpop.f32.mrf.mxu0
    %v1857 = vadd.f32 %v1814, %v1856
    %v1858 = vpop.f32.mrf.mxu0
    %v1859 = vadd.f32 %v1816, %v1858
    %1860 = vdwg.mxu0
    %1861 = vmatprep.subr.bf16.mxu0 %v1309
    %1862 = vmatpush1.bf16.msra.mxu0 %v1308
    %1863 = vmatprep.subr.bf16.mxu0 %v1307
    %1864 = vmatpush1.bf16.msra.mxu0 %v1306
    %1865 = vmatprep.subr.bf16.mxu0 %v1305
    %1866 = vmatpush1.bf16.msra.mxu0 %v1304
    %1867 = vmatprep.subr.bf16.mxu0 %v1303
    %1868 = vmatpush1.bf16.msra.mxu0 %v1302
    %1869 = vmatprep.subr.bf16.mxu0 %v1301
    %1870 = vmatpush1.bf16.msra.mxu0 %v1300
    %1871 = vmatprep.subr.bf16.mxu0 %v1299
    %1872 = vmatpush1.bf16.msra.mxu0 %v1298
    %1873 = vmatprep.subr.bf16.mxu0 %v1297
    %1874 = vmatpush1.bf16.msra.mxu0 %v1296
    %1875 = vmatprep.subr.bf16.mxu0 %v1295
    %1876 = vmatpush1.bf16.msra.mxu0 %v1294
    %1877 = vmatprep.subr.bf16.mxu0 %v1325
    %1878 = vmatpush2.bf16.msra.mxu0 %v1324
    %1879 = vmatprep.subr.bf16.mxu0 %v1323
    %1880 = vmatpush2.bf16.msra.mxu0 %v1322
    %1881 = vmatprep.subr.bf16.mxu0 %v1321
    %1882 = vmatpush2.bf16.msra.mxu0 %v1320
    %1883 = vmatprep.subr.bf16.mxu0 %v1319
    %1884 = vmatpush2.bf16.msra.mxu0 %v1318
    %1885 = vmatprep.subr.bf16.mxu0 %v1317
    %1886 = vmatpush2.bf16.msra.mxu0 %v1316
    %1887 = vmatprep.subr.bf16.mxu0 %v1315
    %1888 = vmatpush2.bf16.msra.mxu0 %v1314
    %1889 = vmatprep.subr.bf16.mxu0 %v1313
    %1890 = vmatpush2.bf16.msra.mxu0 %v1312
    %1891 = vmatprep.subr.bf16.mxu0 %v1311
    %1892 = vmatpush2.bf16.msra.mxu0 %v1310
    %1893 = vmatprep.mubr.bf16.mxu0 %v93
    %1894 = vmatmul.mubr.bf16.gmra.mxu0 %v92
    %v1895 = vpop.f32.mrf.mxu0
    %v1896 = vadd.f32 %v1853, %v1895
    %v1897 = vpop.f32.mrf.mxu0
    %v1898 = vadd.f32 %v1855, %v1897
    %v1899 = vpop.f32.mrf.mxu0
    %v1900 = vadd.f32 %v1857, %v1899
    %v1901 = vpop.f32.mrf.mxu0
    %v1902 = vadd.f32 %v1859, %v1901
    %1903 = vdwg.mxu0
    %1904 = vmatprep.subr.bf16.mxu0 %v1341
    %1905 = vmatpush1.bf16.msra.mxu0 %v1340
    %1906 = vmatprep.subr.bf16.mxu0 %v1339
    %1907 = vmatpush1.bf16.msra.mxu0 %v1338
    %1908 = vmatprep.subr.bf16.mxu0 %v1337
    %1909 = vmatpush1.bf16.msra.mxu0 %v1336
    %1910 = vmatprep.subr.bf16.mxu0 %v1335
    %1911 = vmatpush1.bf16.msra.mxu0 %v1334
    %1912 = vmatprep.subr.bf16.mxu0 %v1333
    %1913 = vmatpush1.bf16.msra.mxu0 %v1332
    %1914 = vmatprep.subr.bf16.mxu0 %v1331
    %1915 = vmatpush1.bf16.msra.mxu0 %v1330
    %1916 = vmatprep.subr.bf16.mxu0 %v1329
    %1917 = vmatpush1.bf16.msra.mxu0 %v1328
    %1918 = vmatprep.subr.bf16.mxu0 %v1327
    %1919 = vmatpush1.bf16.msra.mxu0 %v1326
    %1920 = vmatprep.subr.bf16.mxu0 %v1357
    %1921 = vmatpush2.bf16.msra.mxu0 %v1356
    %1922 = vmatprep.subr.bf16.mxu0 %v1355
    %1923 = vmatpush2.bf16.msra.mxu0 %v1354
    %1924 = vmatprep.subr.bf16.mxu0 %v1353
    %1925 = vmatpush2.bf16.msra.mxu0 %v1352
    %1926 = vmatprep.subr.bf16.mxu0 %v1351
    %1927 = vmatpush2.bf16.msra.mxu0 %v1350
    %1928 = vmatprep.subr.bf16.mxu0 %v1349
    %1929 = vmatpush2.bf16.msra.mxu0 %v1348
    %1930 = vmatprep.subr.bf16.mxu0 %v1347
    %1931 = vmatpush2.bf16.msra.mxu0 %v1346
    %1932 = vmatprep.subr.bf16.mxu0 %v1345
    %1933 = vmatpush2.bf16.msra.mxu0 %v1344
    %1934 = vmatprep.subr.bf16.mxu0 %v1343
    %1935 = vmatpush2.bf16.msra.mxu0 %v1342
    %1936 = vmatprep.mubr.bf16.mxu0 %v95
    %1937 = vmatmul.mubr.bf16.gmra.mxu0 %v94
    %v1938 = vpop.f32.mrf.mxu0
    %v1939 = vadd.f32 %v1896, %v1938
    %v1940 = vpop.f32.mrf.mxu0
    %v1941 = vadd.f32 %v1898, %v1940
    %v1942 = vpop.f32.mrf.mxu0
    %v1943 = vadd.f32 %v1900, %v1942
    %v1944 = vpop.f32.mrf.mxu0
    %v1945 = vadd.f32 %v1902, %v1944
    %1946 = vdwg.mxu0
    %1947 = vmatprep.subr.bf16.mxu0 %v1373
    %1948 = vmatpush1.bf16.msra.mxu0 %v1372
    %1949 = vmatprep.subr.bf16.mxu0 %v1371
    %1950 = vmatpush1.bf16.msra.mxu0 %v1370
    %1951 = vmatprep.subr.bf16.mxu0 %v1369
    %1952 = vmatpush1.bf16.msra.mxu0 %v1368
    %1953 = vmatprep.subr.bf16.mxu0 %v1367
    %1954 = vmatpush1.bf16.msra.mxu0 %v1366
    %1955 = vmatprep.subr.bf16.mxu0 %v1365
    %1956 = vmatpush1.bf16.msra.mxu0 %v1364
    %1957 = vmatprep.subr.bf16.mxu0 %v1363
    %1958 = vmatpush1.bf16.msra.mxu0 %v1362
    %1959 = vmatprep.subr.bf16.mxu0 %v1361
    %1960 = vmatpush1.bf16.msra.mxu0 %v1360
    %1961 = vmatprep.subr.bf16.mxu0 %v1359
    %1962 = vmatpush1.bf16.msra.mxu0 %v1358
    %1963 = vmatprep.subr.bf16.mxu0 %v1389
    %1964 = vmatpush2.bf16.msra.mxu0 %v1388
    %1965 = vmatprep.subr.bf16.mxu0 %v1387
    %1966 = vmatpush2.bf16.msra.mxu0 %v1386
    %1967 = vmatprep.subr.bf16.mxu0 %v1385
    %1968 = vmatpush2.bf16.msra.mxu0 %v1384
    %1969 = vmatprep.subr.bf16.mxu0 %v1383
    %1970 = vmatpush2.bf16.msra.mxu0 %v1382
    %1971 = vmatprep.subr.bf16.mxu0 %v1381
    %1972 = vmatpush2.bf16.msra.mxu0 %v1380
    %1973 = vmatprep.subr.bf16.mxu0 %v1379
    %1974 = vmatpush2.bf16.msra.mxu0 %v1378
    %1975 = vmatprep.subr.bf16.mxu0 %v1377
    %1976 = vmatpush2.bf16.msra.mxu0 %v1376
    %1977 = vmatprep.subr.bf16.mxu0 %v1375
    %1978 = vmatpush2.bf16.msra.mxu0 %v1374
    %1979 = vmatprep.mubr.bf16.mxu0 %v97
    %1980 = vmatmul.mubr.bf16.gmra.mxu0 %v96
    %v1981 = vpop.f32.mrf.mxu0
    %v1982 = vadd.f32 %v1939, %v1981
    %v1983 = vpop.f32.mrf.mxu0
    %v1984 = vadd.f32 %v1941, %v1983
    %v1985 = vpop.f32.mrf.mxu0
    %v1986 = vadd.f32 %v1943, %v1985
    %v1987 = vpop.f32.mrf.mxu0
    %v1988 = vadd.f32 %v1945, %v1987
    %1989 = vdwg.mxu0
    %v1990 = vmax.f32 %v1982, 0.0
    %v1991 = vmax.f32 %v1984, 0.0
    %v1992 = vmax.f32 %v1986, 0.0
    %v1993 = vmax.f32 %v1988, 0.0
    %v1994 = vrot.slane %v1990, 4
    %v1995 = vadd.f32 %v1990, %v1994
    %v1996 = vrot.slane %v1995, 2
    %v1997 = vadd.f32 %v1995, %v1996
    %v1998 = vrot.slane %v1997, 1
    %v1999 = vadd.f32 %v1997, %v1998
    %v2000 = vrot.slane %v1991, 4
    %v2001 = vadd.f32 %v1991, %v2000
    %v2002 = vrot.slane %v2001, 2
    %v2003 = vadd.f32 %v2001, %v2002
    %v2004 = vrot.slane %v2003, 1
    %v2005 = vadd.f32 %v2003, %v2004
    %v2006 = vrot.slane %v1992, 4
    %v2007 = vadd.f32 %v1992, %v2006
    %v2008 = vrot.slane %v2007, 2
    %v2009 = vadd.f32 %v2007, %v2008
    %v2010 = vrot.slane %v2009, 1
    %v2011 = vadd.f32 %v2009, %v2010
    %v2012 = vrot.slane %v1993, 4
    %v2013 = vadd.f32 %v1993, %v2012
    %v2014 = vrot.slane %v2013, 2
    %v2015 = vadd.f32 %v2013, %v2014
    %v2016 = vrot.slane %v2015, 1
    %v2017 = vadd.f32 %v2015, %v2016
    %v2018 = vld [vmem:[%s3] sm:$0x3]
    %v2020 = vlaneseq
    %v2021 = vshrl.u32 %v2020, 7
    %v2022 = vsub.s32 0, %v2021
    %v2023 = vrot.slane %v2018, %v2022
    %v2024 = vlaneseq
    %v2025 = vshrl.u32 %v2024, 7
    %v2026 = vsub.s32 1, %v2025
    %v2027 = vrot.slane %v2018, %v2026
    %v2030 = vmul.f32 %v1999, %v2023
    %v2031 = vmul.f32 %v2005, %v2027
    %v2032 = vmul.f32 %v2011, %v2023
    %v2033 = vmul.f32 %v2017, %v2027
    %v2038 = vrot.slane %v2032, 7
    %vm2039 = vcmask 1041409
    %v2040 = vsel %vm2039, %v2038, %v2030
    %v2041 = vrot.slane %v2033, 7
    %v2042 = vsel %vm2039, %v2041, %v2031
    %vm2045 = vcmask 1041408
    %v2046 = vsel %vm2045, %v2040, 0.0
    %v2047 = vsel %vm2045, %v2042, 0.0
    %v2048 = vadd.f32 %v2046, %v2047
    %2049 = vadd.xlane.f32.xlu0 %v2048
    %v2050 = vpop.xlane.xlu0 %2049
    %v2051 = vld [vmem:[#allocation2] sm:$0x1]
    %v2053 = vlaneseq
    %v2054 = vshrl.u32 %v2053, 7
    %v2055 = vsub.s32 0, %v2054
    %v2056 = vrot.slane %v2051, %v2055
    %v2058 = vadd.f32 %v2050, %v2056
    %v2059 = vxor.u32 %v2058, 2147483648
    %v2060 = vmul.f32 %v2059, 1.442695
    %v2061 = vpow.pop %v2060
    %v2062 = vadd.f32 %v2061, 1.0
    %v2063 = vrcp.pop %v2062
    %v2064 = vmul.f32 1.0, %v2063
    %vm2065 = vcmask 1024
    %2066 = vst.msk [vmem:[%s5] sm:$0x3] %vm2065, %v2064
    // Predicated region
    $region30: #{baseline_forward.1} parent=1 // pred_check
      _
    $region31: #{baseline_forward.1} parent=1 // pred_check_branch
      %2068 = sbr.rel (0) target = $region33
    $region32: #{baseline_forward.1} parent=1 // pred_region
      _
    $region33: #{baseline_forward.1} parent=1 // pred_fallthru
      _
    // Predicated region
    $region34: #{baseline_forward.1} parent=1 // pred_check
      _
    $region35: #{baseline_forward.1} parent=1 // pred_check_branch
      %2070 = sbr.rel (0) target = $region37
    $region36: #{baseline_forward.1} parent=1 // pred_region
      _
    $region37: #{baseline_forward.1} parent=1 // pred_fallthru
      _
    %2071 = vsyncpa [#allocation4], 1
    %2072 = vsyncpa [#allocation6], 1

</llo_original>
